<compile_context>
chip_gen: v7x
topology: tpu7x:2x2x1
jax: 0.10.0
libtpu: 0.0.40
codegen_flags: <defaults>
</compile_context>

<pallas_src>
import functools

import jax
import jax.numpy as jnp
from jax.experimental import pallas as pl
from jax.experimental.pallas import tpu as pltpu

LEAKY_SLOPE = 0.2     # activation used by LinearOutputStack in this codebase
LN_EPS = 1e-5         # PyTorch nn.LayerNorm default eps
N_LAYERS = 3


def _round_up(x, m):
    return ((x + m - 1) // m) * m


# ----------------------- kernel 1: fused MLP stacks ---------------------------

def _dual_layernorm(z, in_first_half, inv_c):
    """Per-half LayerNorm stats over lanes [0,C) and [C,2C) with masked lane
    reductions + broadcast selects (no sub-vreg slice/concat relayouts)."""
    zf = z.astype(jnp.float32)
    sum_a = jnp.sum(jnp.where(in_first_half, zf, 0.0), axis=-1, keepdims=True)
    sum_all = jnp.sum(zf, axis=-1, keepdims=True)
    mu = jnp.where(in_first_half, sum_a, sum_all - sum_a) * inv_c
    d = zf - mu
    dsq = d * d
    ssq_a = jnp.sum(jnp.where(in_first_half, dsq, 0.0), axis=-1, keepdims=True)
    ssq_all = jnp.sum(dsq, axis=-1, keepdims=True)
    var = jnp.where(in_first_half, ssq_a, ssq_all - ssq_a) * inv_c
    return d * jax.lax.rsqrt(var + LN_EPS)


def mlp_kernel(x_ref, w0_ref, wh_ref, bh_ref, gh_ref, bth_ref, wf_ref, bf_ref,
               ampw_ref, ampb_ref, idx_ref, amp_ref):
    x = x_ref[...]                                           # (T, C) f32
    T, C = x.shape
    twoC = 2 * C
    cdt = w0_ref.dtype                                       # MXU compute dtype

    lane = jax.lax.broadcasted_iota(jnp.int32, (T, twoC), 1)  # hoisted once
    in_a = lane < C
    inv_c = jnp.float32(1.0 / C)

    # Layer 0: both stacks see the same x -> single (C, 2C) weight, no zero
    # blocks and no concatenate([x, x]) relayout.
    z = jnp.dot(x.astype(cdt), w0_ref[...],
                preferred_element_type=jnp.float32) + bh_ref[0]
    z = _dual_layernorm(z, in_a, inv_c) * gh_ref[0] + bth_ref[0]
    z = jnp.where(z > 0, z, LEAKY_SLOPE * z)                 # LeakyReLU(0.2)

    # Layers 1..2: block-diagonal (2C, 2C) -> fills the 256-wide MXU (v6e/v7x).
    for l in range(1, N_LAYERS):
        z = jnp.dot(z.astype(cdt), wh_ref[l - 1],
                    preferred_element_type=jnp.float32) + bh_ref[l]
        z = _dual_layernorm(z, in_a, inv_c) * gh_ref[l] + bth_ref[l]
        z = jnp.where(z > 0, z, LEAKY_SLOPE * z)

    # Final atom projection only (no +1 amps column -> no extra MXU lane group).
    # The zero bottom half of wf costs nothing on a 256-deep MXU contraction.
    logits = jnp.dot(z.astype(cdt), wf_ref[...],
                     preferred_element_type=jnp.float32) + bf_ref[...]

    # amps head: VPU multiply + one lane reduce over the amp-half of z.
    amps = jnp.sum(z * ampw_ref[...], axis=-1, keepdims=True) + ampb_ref[...]

    # soft_dirac forward value = one-hot at argmax(softmax) == argmax(logits)
    # (softmax is monotonic).  Only the index is emitted; the atom row itself
    # is gathered by kernel 2 via manual DMA.
    n_atoms = logits.shape[-1]
    m = jnp.max(logits, axis=-1, keepdims=True)
    acol = jax.lax.broadcasted_iota(jnp.int32, logits.shape, 1)
    idx_ref[...] = jnp.min(jnp.where(logits == m, acol, n_atoms),
                           axis=-1, keepdims=True)           # (T, 1) int32
    amp_ref[...] = amps                                      # (T, 1) f32


# ------------- kernel 2: batched atom-row gather + amplitude scale ------------

def gather_scale_kernel(idx_ref, amps_ref, atoms_hbm, out_ref, buf, sems, *,
                        rows_per_step):
    # idx_ref lives in SMEM (scalar prefetch); atoms_hbm stays in HBM (pl.ANY).
    base = pl.program_id(0) * rows_per_step
    # Issue all per-row gather DMAs up front (they overlap), then wait.
    for g in range(rows_per_step):
        pltpu.make_async_copy(atoms_hbm.at[idx_ref[base + g]],
                              buf.at[g], sems.at[g]).start()
    for g in range(rows_per_step):
        pltpu.make_async_copy(atoms_hbm.at[0], buf.at[g], sems.at[g]).wait()
    out_ref[...] = buf[...] * amps_ref[...]                  # (G,1,K)*(G,1,1)


# ----------------------------- wrapper ---------------------------------------

def _fuse_params(params, compute_dtype):
    """Pack the two 3-layer stacks for the fused MLP kernel."""
    wa, wm = params["wa"], params["wm"]                      # (L, C, C)
    L, C, _ = wa.shape
    n_atoms = params["waf"].shape[-1]

    # Layer 0: shared input -> (C, 2C), no zero blocks.
    w0 = jnp.concatenate([wa[0], wm[0]], axis=-1)
    # Layers 1..L-1: block-diagonal (2C, 2C).
    zcc = jnp.zeros((L - 1, C, C), jnp.float32)
    wh = jnp.concatenate(
        [jnp.concatenate([wa[1:], zcc], axis=-1),
         jnp.concatenate([zcc, wm[1:]], axis=-1)], axis=1)   # (L-1, 2C, 2C)

    bh = jnp.concatenate([params["ba"], params["bm"]], axis=-1)     # (L, 2C)
    gh = jnp.concatenate([params["ga"], params["gm"]], axis=-1)     # (L, 2C)
    bth = jnp.concatenate([params["bta"], params["btm"]], axis=-1)  # (L, 2C)

    # Final atom projection only (amps column removed).
    wf = jnp.concatenate([params["waf"],
                          jnp.zeros((C, n_atoms), jnp.float32)], axis=0)  # (2C,A)
    bf = params["baf"][None, :]                                           # (1,A)

    # amps head as a masked lane vector (zeros over the atom half).
    ampw = jnp.concatenate([jnp.zeros((C,), jnp.float32),
                            params["wmf"][:, 0]], axis=0)[None, :]        # (1,2C)
    ampb = params["bmf"].reshape(1, 1)                                    # (1,1)

    return (w0.astype(compute_dtype), wh.astype(compute_dtype), bh, gh, bth,
            wf.astype(compute_dtype), bf, ampw, ampb)


def generator_forward(x, params, *, compute_dtype=jnp.bfloat16, max_tile_n=256,
                      gather_rows_per_step=8):
    """x: (batch, n_events, channels) f32 -> (batch, n_events, kernel_size) f32."""
    batch, n_events, C = x.shape
    N = batch * n_events
    n_atoms, K = params["atoms"].shape
    twoC = 2 * C

    w0, wh, bh, gh, bth, wf, bf, ampw, ampb = _fuse_params(params, compute_dtype)

    # ---- kernel 1 tiling: minimize zero-row padding; >=2 steps when N>8 so
    #      v7x's two TensorCores both get work under "parallel" semantics. ----
    num_steps = max(pl.cdiv(N, max_tile_n), 2 if N > 8 else 1)
    tile_n = _round_up(pl.cdiv(N, num_steps), 8)
    Np = _round_up(N, tile_n)
    xf = x.reshape(N, C).astype(jnp.float32)
    if Np != N:
        xf = jnp.pad(xf, ((0, Np - N), (0, 0)))

    full2 = lambda i: (0, 0)
    full3 = lambda i: (0, 0, 0)

    w_bytes = int(w0.size * w0.dtype.itemsize + wh.size * wh.dtype.itemsize
                  + wf.size * wf.dtype.itemsize
                  + 4 * (bh.size + gh.size + bth.size + bf.size
                         + ampw.size + ampb.size))
    cost = pl.CostEstimate(
        flops=int(2 * Np * (C * twoC + (N_LAYERS - 1) * twoC * twoC
                            + twoC * n_atoms + twoC)),
        transcendentals=int(2 * N_LAYERS * Np),
        bytes_accessed=int(Np * C * 4 + w_bytes + Np * 8),
    )

    idx2d, amps2d = pl.pallas_call(
        mlp_kernel,
        out_shape=(jax.ShapeDtypeStruct((Np, 1), jnp.int32),
                   jax.ShapeDtypeStruct((Np, 1), jnp.float32)),
        grid=(Np // tile_n,),
        in_specs=[
            pl.BlockSpec((tile_n, C), lambda i: (i, 0)),          # x rows
            pl.BlockSpec((C, twoC), full2),                       # layer-0 W
            pl.BlockSpec((N_LAYERS - 1, twoC, twoC), full3),      # hidden W
            pl.BlockSpec((N_LAYERS, twoC), full2),                # hidden b
            pl.BlockSpec((N_LAYERS, twoC), full2),                # LN gamma
            pl.BlockSpec((N_LAYERS, twoC), full2),                # LN beta
            pl.BlockSpec((twoC, n_atoms), full2),                 # final atom W
            pl.BlockSpec((1, n_atoms), full2),                    # final atom b
            pl.BlockSpec((1, twoC), full2),                       # amps W (masked)
            pl.BlockSpec((1, 1), full2),                          # amps b
        ],
        out_specs=(pl.BlockSpec((tile_n, 1), lambda i: (i, 0)),   # argmax idx
                   pl.BlockSpec((tile_n, 1), lambda i: (i, 0))),  # amplitude
        compiler_params=pltpu.CompilerParams(
            dimension_semantics=("parallel",),
            vmem_limit_bytes=32 * 1024 * 1024),
        cost_estimate=cost,
    )(xf, w0, wh, bh, gh, bth, wf, bf, ampw, ampb)

    # ---- kernel 2: batched manual-DMA gather from HBM + amplitude scale -----
    G = gather_rows_per_step
    assert Np % G == 0, (Np, G)        # tile_n is a multiple of 8, so Np is too
    idx = idx2d[:, 0]                                    # (Np,) int32, all valid
    amps3 = amps2d.reshape(Np, 1, 1)                     # (Np, 1, 1) f32
    atoms3 = params["atoms"].reshape(n_atoms, 1, K)      # lane-dense rows (HBM)

    out3 = pl.pallas_call(
        functools.partial(gather_scale_kernel, rows_per_step=G),
        out_shape=jax.ShapeDtypeStruct((Np, 1, K), jnp.float32),
        grid_spec=pltpu.PrefetchScalarGridSpec(
            num_scalar_prefetch=1,
            grid=(Np // G,),
            in_specs=[
                pl.BlockSpec((G, 1, 1), lambda i, idx_sref: (i, 0, 0)),  # amps
                pl.BlockSpec(memory_space=pl.ANY),                       # atoms
            ],
            out_specs=pl.BlockSpec((G, 1, K), lambda i, idx_sref: (i, 0, 0)),
            scratch_shapes=[pltpu.VMEM((G, 1, K), jnp.float32),
                            pltpu.SemaphoreType.DMA((G,))],
        ),
        compiler_params=pltpu.CompilerParams(
            dimension_semantics=("parallel",)),
    )(idx, amps3, atoms3)

    return out3[:N, 0, :].reshape(batch, n_events, K)


# ------------------------ deterministic parameter init ------------------------

def _linear_init(key, fan_in, fan_out):
    bound = 1.0 / jnp.sqrt(jnp.float32(fan_in))
    kw, kb = jax.random.split(key)
    w = jax.random.uniform(kw, (fan_in, fan_out), jnp.float32, -bound, bound)
    b = jax.random.uniform(kb, (fan_out,), jnp.float32, -bound, bound)
    return w, b


def _stack_init(key, channels, out_channels):
    keys = jax.random.split(key, N_LAYERS + 1)
    ws, bs = [], []
    for l in range(N_LAYERS):
        w, b = _linear_init(keys[l], channels, channels)
        ws.append(w)
        bs.append(b)
    wf, bf = _linear_init(keys[-1], channels, out_channels)
    gamma = jnp.ones((N_LAYERS, channels), jnp.float32)
    beta = jnp.zeros((N_LAYERS, channels), jnp.float32)
    return jnp.stack(ws), jnp.stack(bs), gamma, beta, wf, bf


def make_filter_bank(n_atoms, kernel_size):
    """Deterministic mel-spaced, hann-windowed sine bank standing in for `fb`."""
    sr = 22050.0
    t = jnp.arange(kernel_size, dtype=jnp.float32)
    mel = jnp.linspace(2595.0 * jnp.log10(1.0 + 20.0 / 700.0),
                       2595.0 * jnp.log10(1.0 + 2000.0 / 700.0),
                       n_atoms)
    hz = 700.0 * (10.0 ** (mel / 2595.0) - 1.0)
    phase = 2.0 * jnp.pi * hz[:, None] * t[None, :] / sr
    window = 0.5 - 0.5 * jnp.cos(2.0 * jnp.pi * t / (kernel_size - 1))
    return (jnp.sin(phase) * window[None, :]).astype(jnp.float32)


def init_params(key, channels, n_atoms, kernel_size):
    ka, km = jax.random.split(key)
    wa, ba, ga, bta, waf, baf = _stack_init(ka, channels, n_atoms)
    wm, bm, gm, btm, wmf, bmf = _stack_init(km, channels, 1)
    return dict(wa=wa, ba=ba, ga=ga, bta=bta, waf=waf, baf=baf,
                wm=wm, bm=bm, gm=gm, btm=btm, wmf=wmf, bmf=bmf,
                atoms=make_filter_bank(n_atoms, kernel_size))


# ------------------------------ pure-JAX reference ----------------------------

def reference_forward(x, params):
    batch, n_events, C = x.shape
    xf = x.reshape(-1, C)

    def stack(h, w, b, g, bt, wf, bf):
        for l in range(N_LAYERS):
            h = h @ w[l] + b[l]
            mu = h.mean(-1, keepdims=True)
            var = ((h - mu) ** 2).mean(-1, keepdims=True)
            h = (h - mu) * jax.lax.rsqrt(var + LN_EPS) * g[l] + bt[l]
            h = jnp.where(h > 0, h, LEAKY_SLOPE * h)
        return h @ wf + bf

    logits = stack(xf, params["wa"], params["ba"], params["ga"], params["bta"],
                   params["waf"], params["baf"])
    amps = stack(xf, params["wm"], params["bm"], params["gm"], params["btm"],
                 params["wmf"], params["bmf"])
    one_hot = jax.nn.one_hot(jnp.argmax(logits, -1), logits.shape[-1],
                             dtype=jnp.float32)
    out = (one_hot @ params["atoms"]) * amps
    return out.reshape(batch, -1, params["atoms"].shape[-1])


# ----------------------------------- main -------------------------------------

if __name__ == "__main__":
    # Small, module-consistent shapes (original uses n_atoms=kernel_size=1024).
    batch, n_events, channels = 2, 8, 32
    n_atoms, kernel_size = 128, 256

    key = jax.random.PRNGKey(0)
    kx, kp = jax.random.split(key)
    x = jax.random.normal(kx, (batch, n_events, channels), jnp.float32)
    params = init_params(kp, channels, n_atoms, kernel_size)

    # Exact-parity check against the pure-JAX reference (f32 MXU compute).
    out = jax.block_until_ready(
        generator_forward(x, params, compute_dtype=jnp.float32))
    assert out.shape == (batch, n_events, kernel_size), out.shape

    ref = jax.block_until_ready(reference_forward(x, params))
    if not jnp.allclose(out, ref, atol=1e-4, rtol=1e-4):
        raise AssertionError("Pallas kernel output mismatch vs. pure-JAX reference")

    # Exercise the production bf16 MXU path (f32 accumulation); argmax can
    # legitimately flip on near-ties, so only check shape / finiteness here.
    out_bf16 = jax.block_until_ready(generator_forward(x, params))
    assert out_bf16.shape == (batch, n_events, kernel_size), out_bf16.shape
    assert bool(jnp.all(jnp.isfinite(out_bf16)))

    print("KERNEL_OK")
</pallas_src>

<mosaic_0001>
module attributes {stable_mosaic.version = 11 : i64} {
  func.func @mlp_kernel(%arg0: i32, %arg1: memref<8x32xf32, #tpu.memory_space<vmem>>, %arg2: memref<32x64xf32, #tpu.memory_space<vmem>>, %arg3: memref<2x64x64xf32, #tpu.memory_space<vmem>>, %arg4: memref<3x64xf32, #tpu.memory_space<vmem>>, %arg5: memref<3x64xf32, #tpu.memory_space<vmem>>, %arg6: memref<3x64xf32, #tpu.memory_space<vmem>>, %arg7: memref<64x128xf32, #tpu.memory_space<vmem>>, %arg8: memref<1x128xf32, #tpu.memory_space<vmem>>, %arg9: memref<1x64xf32, #tpu.memory_space<vmem>>, %arg10: memref<1x1xf32, #tpu.memory_space<vmem>>, %arg11: memref<8x1xi32, #tpu.memory_space<vmem>>, %arg12: memref<8x1xf32, #tpu.memory_space<vmem>>) attributes {dimension_semantics = [#tpu.dimension_semantics<parallel>], iteration_bounds = array<i64: 2>, scalar_prefetch = 0 : i64, scratch_operands = 0 : i64, tpu.core_type = #tpu.core_type<tc>, window_params = [{transform_indices = @transform_0, window_bounds = array<i64: 8, 32>}, {pipeline_mode = #tpu.pipeline_mode<synchronous>, transform_indices = @transform_1, window_bounds = array<i64: 32, 64>}, {pipeline_mode = #tpu.pipeline_mode<synchronous>, transform_indices = @transform_2, window_bounds = array<i64: 2, 64, 64>}, {pipeline_mode = #tpu.pipeline_mode<synchronous>, transform_indices = @transform_3, window_bounds = array<i64: 3, 64>}, {pipeline_mode = #tpu.pipeline_mode<synchronous>, transform_indices = @transform_4, window_bounds = array<i64: 3, 64>}, {pipeline_mode = #tpu.pipeline_mode<synchronous>, transform_indices = @transform_5, window_bounds = array<i64: 3, 64>}, {pipeline_mode = #tpu.pipeline_mode<synchronous>, transform_indices = @transform_6, window_bounds = array<i64: 64, 128>}, {pipeline_mode = #tpu.pipeline_mode<synchronous>, transform_indices = @transform_7, window_bounds = array<i64: 1, 128>}, {pipeline_mode = #tpu.pipeline_mode<synchronous>, transform_indices = @transform_8, window_bounds = array<i64: 1, 64>}, {pipeline_mode = #tpu.pipeline_mode<synchronous>, transform_indices = @transform_9, window_bounds = array<i64: 1, 1>}, {transform_indices = @transform_10, window_bounds = array<i64: 8, 1>}, {transform_indices = @transform_11, window_bounds = array<i64: 8, 1>}]} {
    %c0 = arith.constant 0 : index
    %c0_0 = arith.constant 0 : index
    %0 = vector.load %arg1[%c0, %c0_0] : memref<8x32xf32, #tpu.memory_space<vmem>>, vector<8x32xf32>
    %1 = tpu.iota {dimensions = array<i32: 1>} : vector<8x64xi32>
    %c32_i32 = arith.constant 32 : i32
    %2 = vector.broadcast %c32_i32 : i32 to vector<8x64xi32>
    %3 = arith.cmpi slt, %1, %2 : vector<8x64xi32>
    %c0_1 = arith.constant 0 : index
    %c0_2 = arith.constant 0 : index
    %4 = vector.load %arg2[%c0_1, %c0_2] : memref<32x64xf32, #tpu.memory_space<vmem>>, vector<32x64xf32>
    %cst = arith.constant dense<0.000000e+00> : vector<8x64xf32>
    %5 = tpu.matmul %0, %4, %cst {dimension_numbers = #tpu.dot_dimension_numbers<[1], [0], [0], [1], [0, 0, 1, 1], [], []>} : vector<8x32xf32>, vector<32x64xf32>, vector<8x64xf32> -> vector<8x64xf32>
    %c0_3 = arith.constant 0 : index
    %c0_4 = arith.constant 0 : index
    %6 = vector.load %arg4[%c0_3, %c0_4] : memref<3x64xf32, #tpu.memory_space<vmem>>, vector<1x64xf32>
    %7 = vector.shape_cast %6 : vector<1x64xf32> to vector<64xf32>
    %8 = vector.shape_cast %7 : vector<64xf32> to vector<1x64xf32>
    %9 = vector.broadcast %8 : vector<1x64xf32> to vector<8x64xf32>
    %10 = arith.addf %5, %9 : vector<8x64xf32>
    %cst_5 = arith.constant 0.000000e+00 : f32
    %11 = vector.broadcast %cst_5 : f32 to vector<8x64xf32>
    %12 = arith.select %3, %10, %11 : vector<8x64xi1>, vector<8x64xf32>
    %cst_6 = arith.constant dense<0.000000e+00> : vector<8xf32>
    %13 = vector.multi_reduction <add>, %12, %cst_6 [1] : vector<8x64xf32> to vector<8xf32>
    %14 = vector.shape_cast %13 : vector<8xf32> to vector<8x1xf32>
    %cst_7 = arith.constant dense<0.000000e+00> : vector<8xf32>
    %15 = vector.multi_reduction <add>, %10, %cst_7 [1] : vector<8x64xf32> to vector<8xf32>
    %16 = vector.shape_cast %15 : vector<8xf32> to vector<8x1xf32>
    %17 = arith.subf %16, %14 : vector<8x1xf32>
    %18 = vector.shape_cast %14 : vector<8x1xf32> to vector<8x1xf32>
    %19 = vector.broadcast %18 : vector<8x1xf32> to vector<8x64xf32>
    %20 = vector.shape_cast %17 : vector<8x1xf32> to vector<8x1xf32>
    %21 = vector.broadcast %20 : vector<8x1xf32> to vector<8x64xf32>
    %22 = arith.select %3, %19, %21 : vector<8x64xi1>, vector<8x64xf32>
    %cst_8 = arith.constant 3.125000e-02 : f32
    %23 = vector.broadcast %cst_8 : f32 to vector<8x64xf32>
    %24 = arith.mulf %22, %23 : vector<8x64xf32>
    %25 = arith.subf %10, %24 : vector<8x64xf32>
    %26 = arith.mulf %25, %25 : vector<8x64xf32>
    %cst_9 = arith.constant 0.000000e+00 : f32
    %27 = vector.broadcast %cst_9 : f32 to vector<8x64xf32>
    %28 = arith.select %3, %26, %27 : vector<8x64xi1>, vector<8x64xf32>
    %cst_10 = arith.constant dense<0.000000e+00> : vector<8xf32>
    %29 = vector.multi_reduction <add>, %28, %cst_10 [1] : vector<8x64xf32> to vector<8xf32>
    %30 = vector.shape_cast %29 : vector<8xf32> to vector<8x1xf32>
    %cst_11 = arith.constant dense<0.000000e+00> : vector<8xf32>
    %31 = vector.multi_reduction <add>, %26, %cst_11 [1] : vector<8x64xf32> to vector<8xf32>
    %32 = vector.shape_cast %31 : vector<8xf32> to vector<8x1xf32>
    %33 = arith.subf %32, %30 : vector<8x1xf32>
    %34 = vector.shape_cast %30 : vector<8x1xf32> to vector<8x1xf32>
    %35 = vector.broadcast %34 : vector<8x1xf32> to vector<8x64xf32>
    %36 = vector.shape_cast %33 : vector<8x1xf32> to vector<8x1xf32>
    %37 = vector.broadcast %36 : vector<8x1xf32> to vector<8x64xf32>
    %38 = arith.select %3, %35, %37 : vector<8x64xi1>, vector<8x64xf32>
    %cst_12 = arith.constant 3.125000e-02 : f32
    %39 = vector.broadcast %cst_12 : f32 to vector<8x64xf32>
    %40 = arith.mulf %38, %39 : vector<8x64xf32>
    %cst_13 = arith.constant 9.99999974E-6 : f32
    %41 = vector.broadcast %cst_13 : f32 to vector<8x64xf32>
    %42 = arith.addf %40, %41 : vector<8x64xf32>
    %43 = math.rsqrt %42 : vector<8x64xf32>
    %44 = arith.mulf %25, %43 : vector<8x64xf32>
    %c0_14 = arith.constant 0 : index
    %c0_15 = arith.constant 0 : index
    %45 = vector.load %arg5[%c0_14, %c0_15] : memref<3x64xf32, #tpu.memory_space<vmem>>, vector<1x64xf32>
    %46 = vector.shape_cast %45 : vector<1x64xf32> to vector<64xf32>
    %47 = vector.shape_cast %46 : vector<64xf32> to vector<1x64xf32>
    %48 = vector.broadcast %47 : vector<1x64xf32> to vector<8x64xf32>
    %49 = arith.mulf %44, %48 : vector<8x64xf32>
    %c0_16 = arith.constant 0 : index
    %c0_17 = arith.constant 0 : index
    %50 = vector.load %arg6[%c0_16, %c0_17] : memref<3x64xf32, #tpu.memory_space<vmem>>, vector<1x64xf32>
    %51 = vector.shape_cast %50 : vector<1x64xf32> to vector<64xf32>
    %52 = vector.shape_cast %51 : vector<64xf32> to vector<1x64xf32>
    %53 = vector.broadcast %52 : vector<1x64xf32> to vector<8x64xf32>
    %54 = arith.addf %49, %53 : vector<8x64xf32>
    %cst_18 = arith.constant 0.000000e+00 : f32
    %55 = vector.broadcast %cst_18 : f32 to vector<8x64xf32>
    %56 = arith.cmpf ogt, %54, %55 : vector<8x64xf32>
    %cst_19 = arith.constant 2.000000e-01 : f32
    %57 = vector.broadcast %cst_19 : f32 to vector<8x64xf32>
    %58 = arith.mulf %57, %54 : vector<8x64xf32>
    %59 = arith.select %56, %54, %58 : vector<8x64xi1>, vector<8x64xf32>
    %c0_20 = arith.constant 0 : index
    %c0_21 = arith.constant 0 : index
    %c0_22 = arith.constant 0 : index
    %60 = vector.load %arg3[%c0_20, %c0_21, %c0_22] : memref<2x64x64xf32, #tpu.memory_space<vmem>>, vector<1x64x64xf32>
    %61 = vector.shape_cast %60 : vector<1x64x64xf32> to vector<64x64xf32>
    %cst_23 = arith.constant dense<0.000000e+00> : vector<8x64xf32>
    %62 = tpu.matmul %59, %61, %cst_23 {dimension_numbers = #tpu.dot_dimension_numbers<[1], [0], [0], [1], [0, 0, 1, 1], [], []>} : vector<8x64xf32>, vector<64x64xf32>, vector<8x64xf32> -> vector<8x64xf32>
    %c1 = arith.constant 1 : index
    %c0_24 = arith.constant 0 : index
    %63 = vector.load %arg4[%c1, %c0_24] : memref<3x64xf32, #tpu.memory_space<vmem>>, vector<1x64xf32>
    %64 = vector.shape_cast %63 : vector<1x64xf32> to vector<64xf32>
    %65 = vector.shape_cast %64 : vector<64xf32> to vector<1x64xf32>
    %66 = vector.broadcast %65 : vector<1x64xf32> to vector<8x64xf32>
    %67 = arith.addf %62, %66 : vector<8x64xf32>
    %cst_25 = arith.constant 0.000000e+00 : f32
    %68 = vector.broadcast %cst_25 : f32 to vector<8x64xf32>
    %69 = arith.select %3, %67, %68 : vector<8x64xi1>, vector<8x64xf32>
    %cst_26 = arith.constant dense<0.000000e+00> : vector<8xf32>
    %70 = vector.multi_reduction <add>, %69, %cst_26 [1] : vector<8x64xf32> to vector<8xf32>
    %71 = vector.shape_cast %70 : vector<8xf32> to vector<8x1xf32>
    %cst_27 = arith.constant dense<0.000000e+00> : vector<8xf32>
    %72 = vector.multi_reduction <add>, %67, %cst_27 [1] : vector<8x64xf32> to vector<8xf32>
    %73 = vector.shape_cast %72 : vector<8xf32> to vector<8x1xf32>
    %74 = arith.subf %73, %71 : vector<8x1xf32>
    %75 = vector.shape_cast %71 : vector<8x1xf32> to vector<8x1xf32>
    %76 = vector.broadcast %75 : vector<8x1xf32> to vector<8x64xf32>
    %77 = vector.shape_cast %74 : vector<8x1xf32> to vector<8x1xf32>
    %78 = vector.broadcast %77 : vector<8x1xf32> to vector<8x64xf32>
    %79 = arith.select %3, %76, %78 : vector<8x64xi1>, vector<8x64xf32>
    %cst_28 = arith.constant 3.125000e-02 : f32
    %80 = vector.broadcast %cst_28 : f32 to vector<8x64xf32>
    %81 = arith.mulf %79, %80 : vector<8x64xf32>
    %82 = arith.subf %67, %81 : vector<8x64xf32>
    %83 = arith.mulf %82, %82 : vector<8x64xf32>
    %cst_29 = arith.constant 0.000000e+00 : f32
    %84 = vector.broadcast %cst_29 : f32 to vector<8x64xf32>
    %85 = arith.select %3, %83, %84 : vector<8x64xi1>, vector<8x64xf32>
    %cst_30 = arith.constant dense<0.000000e+00> : vector<8xf32>
    %86 = vector.multi_reduction <add>, %85, %cst_30 [1] : vector<8x64xf32> to vector<8xf32>
    %87 = vector.shape_cast %86 : vector<8xf32> to vector<8x1xf32>
    %cst_31 = arith.constant dense<0.000000e+00> : vector<8xf32>
    %88 = vector.multi_reduction <add>, %83, %cst_31 [1] : vector<8x64xf32> to vector<8xf32>
    %89 = vector.shape_cast %88 : vector<8xf32> to vector<8x1xf32>
    %90 = arith.subf %89, %87 : vector<8x1xf32>
    %91 = vector.shape_cast %87 : vector<8x1xf32> to vector<8x1xf32>
    %92 = vector.broadcast %91 : vector<8x1xf32> to vector<8x64xf32>
    %93 = vector.shape_cast %90 : vector<8x1xf32> to vector<8x1xf32>
    %94 = vector.broadcast %93 : vector<8x1xf32> to vector<8x64xf32>
    %95 = arith.select %3, %92, %94 : vector<8x64xi1>, vector<8x64xf32>
    %cst_32 = arith.constant 3.125000e-02 : f32
    %96 = vector.broadcast %cst_32 : f32 to vector<8x64xf32>
    %97 = arith.mulf %95, %96 : vector<8x64xf32>
    %cst_33 = arith.constant 9.99999974E-6 : f32
    %98 = vector.broadcast %cst_33 : f32 to vector<8x64xf32>
    %99 = arith.addf %97, %98 : vector<8x64xf32>
    %100 = math.rsqrt %99 : vector<8x64xf32>
    %101 = arith.mulf %82, %100 : vector<8x64xf32>
    %c1_34 = arith.constant 1 : index
    %c0_35 = arith.constant 0 : index
    %102 = vector.load %arg5[%c1_34, %c0_35] : memref<3x64xf32, #tpu.memory_space<vmem>>, vector<1x64xf32>
    %103 = vector.shape_cast %102 : vector<1x64xf32> to vector<64xf32>
    %104 = vector.shape_cast %103 : vector<64xf32> to vector<1x64xf32>
    %105 = vector.broadcast %104 : vector<1x64xf32> to vector<8x64xf32>
    %106 = arith.mulf %101, %105 : vector<8x64xf32>
    %c1_36 = arith.constant 1 : index
    %c0_37 = arith.constant 0 : index
    %107 = vector.load %arg6[%c1_36, %c0_37] : memref<3x64xf32, #tpu.memory_space<vmem>>, vector<1x64xf32>
    %108 = vector.shape_cast %107 : vector<1x64xf32> to vector<64xf32>
    %109 = vector.shape_cast %108 : vector<64xf32> to vector<1x64xf32>
    %110 = vector.broadcast %109 : vector<1x64xf32> to vector<8x64xf32>
    %111 = arith.addf %106, %110 : vector<8x64xf32>
    %cst_38 = arith.constant 0.000000e+00 : f32
    %112 = vector.broadcast %cst_38 : f32 to vector<8x64xf32>
    %113 = arith.cmpf ogt, %111, %112 : vector<8x64xf32>
    %cst_39 = arith.constant 2.000000e-01 : f32
    %114 = vector.broadcast %cst_39 : f32 to vector<8x64xf32>
    %115 = arith.mulf %114, %111 : vector<8x64xf32>
    %116 = arith.select %113, %111, %115 : vector<8x64xi1>, vector<8x64xf32>
    %c1_40 = arith.constant 1 : index
    %c0_41 = arith.constant 0 : index
    %c0_42 = arith.constant 0 : index
    %117 = vector.load %arg3[%c1_40, %c0_41, %c0_42] : memref<2x64x64xf32, #tpu.memory_space<vmem>>, vector<1x64x64xf32>
    %118 = vector.shape_cast %117 : vector<1x64x64xf32> to vector<64x64xf32>
    %cst_43 = arith.constant dense<0.000000e+00> : vector<8x64xf32>
    %119 = tpu.matmul %116, %118, %cst_43 {dimension_numbers = #tpu.dot_dimension_numbers<[1], [0], [0], [1], [0, 0, 1, 1], [], []>} : vector<8x64xf32>, vector<64x64xf32>, vector<8x64xf32> -> vector<8x64xf32>
    %c2 = arith.constant 2 : index
    %c0_44 = arith.constant 0 : index
    %120 = vector.load %arg4[%c2, %c0_44] : memref<3x64xf32, #tpu.memory_space<vmem>>, vector<1x64xf32>
    %121 = vector.shape_cast %120 : vector<1x64xf32> to vector<64xf32>
    %122 = vector.shape_cast %121 : vector<64xf32> to vector<1x64xf32>
    %123 = vector.broadcast %122 : vector<1x64xf32> to vector<8x64xf32>
    %124 = arith.addf %119, %123 : vector<8x64xf32>
    %cst_45 = arith.constant 0.000000e+00 : f32
    %125 = vector.broadcast %cst_45 : f32 to vector<8x64xf32>
    %126 = arith.select %3, %124, %125 : vector<8x64xi1>, vector<8x64xf32>
    %cst_46 = arith.constant dense<0.000000e+00> : vector<8xf32>
    %127 = vector.multi_reduction <add>, %126, %cst_46 [1] : vector<8x64xf32> to vector<8xf32>
    %128 = vector.shape_cast %127 : vector<8xf32> to vector<8x1xf32>
    %cst_47 = arith.constant dense<0.000000e+00> : vector<8xf32>
    %129 = vector.multi_reduction <add>, %124, %cst_47 [1] : vector<8x64xf32> to vector<8xf32>
    %130 = vector.shape_cast %129 : vector<8xf32> to vector<8x1xf32>
    %131 = arith.subf %130, %128 : vector<8x1xf32>
    %132 = vector.shape_cast %128 : vector<8x1xf32> to vector<8x1xf32>
    %133 = vector.broadcast %132 : vector<8x1xf32> to vector<8x64xf32>
    %134 = vector.shape_cast %131 : vector<8x1xf32> to vector<8x1xf32>
    %135 = vector.broadcast %134 : vector<8x1xf32> to vector<8x64xf32>
    %136 = arith.select %3, %133, %135 : vector<8x64xi1>, vector<8x64xf32>
    %cst_48 = arith.constant 3.125000e-02 : f32
    %137 = vector.broadcast %cst_48 : f32 to vector<8x64xf32>
    %138 = arith.mulf %136, %137 : vector<8x64xf32>
    %139 = arith.subf %124, %138 : vector<8x64xf32>
    %140 = arith.mulf %139, %139 : vector<8x64xf32>
    %cst_49 = arith.constant 0.000000e+00 : f32
    %141 = vector.broadcast %cst_49 : f32 to vector<8x64xf32>
    %142 = arith.select %3, %140, %141 : vector<8x64xi1>, vector<8x64xf32>
    %cst_50 = arith.constant dense<0.000000e+00> : vector<8xf32>
    %143 = vector.multi_reduction <add>, %142, %cst_50 [1] : vector<8x64xf32> to vector<8xf32>
    %144 = vector.shape_cast %143 : vector<8xf32> to vector<8x1xf32>
    %cst_51 = arith.constant dense<0.000000e+00> : vector<8xf32>
    %145 = vector.multi_reduction <add>, %140, %cst_51 [1] : vector<8x64xf32> to vector<8xf32>
    %146 = vector.shape_cast %145 : vector<8xf32> to vector<8x1xf32>
    %147 = arith.subf %146, %144 : vector<8x1xf32>
    %148 = vector.shape_cast %144 : vector<8x1xf32> to vector<8x1xf32>
    %149 = vector.broadcast %148 : vector<8x1xf32> to vector<8x64xf32>
    %150 = vector.shape_cast %147 : vector<8x1xf32> to vector<8x1xf32>
    %151 = vector.broadcast %150 : vector<8x1xf32> to vector<8x64xf32>
    %152 = arith.select %3, %149, %151 : vector<8x64xi1>, vector<8x64xf32>
    %cst_52 = arith.constant 3.125000e-02 : f32
    %153 = vector.broadcast %cst_52 : f32 to vector<8x64xf32>
    %154 = arith.mulf %152, %153 : vector<8x64xf32>
    %cst_53 = arith.constant 9.99999974E-6 : f32
    %155 = vector.broadcast %cst_53 : f32 to vector<8x64xf32>
    %156 = arith.addf %154, %155 : vector<8x64xf32>
    %157 = math.rsqrt %156 : vector<8x64xf32>
    %158 = arith.mulf %139, %157 : vector<8x64xf32>
    %c2_54 = arith.constant 2 : index
    %c0_55 = arith.constant 0 : index
    %159 = vector.load %arg5[%c2_54, %c0_55] : memref<3x64xf32, #tpu.memory_space<vmem>>, vector<1x64xf32>
    %160 = vector.shape_cast %159 : vector<1x64xf32> to vector<64xf32>
    %161 = vector.shape_cast %160 : vector<64xf32> to vector<1x64xf32>
    %162 = vector.broadcast %161 : vector<1x64xf32> to vector<8x64xf32>
    %163 = arith.mulf %158, %162 : vector<8x64xf32>
    %c2_56 = arith.constant 2 : index
    %c0_57 = arith.constant 0 : index
    %164 = vector.load %arg6[%c2_56, %c0_57] : memref<3x64xf32, #tpu.memory_space<vmem>>, vector<1x64xf32>
    %165 = vector.shape_cast %164 : vector<1x64xf32> to vector<64xf32>
    %166 = vector.shape_cast %165 : vector<64xf32> to vector<1x64xf32>
    %167 = vector.broadcast %166 : vector<1x64xf32> to vector<8x64xf32>
    %168 = arith.addf %163, %167 : vector<8x64xf32>
    %cst_58 = arith.constant 0.000000e+00 : f32
    %169 = vector.broadcast %cst_58 : f32 to vector<8x64xf32>
    %170 = arith.cmpf ogt, %168, %169 : vector<8x64xf32>
    %cst_59 = arith.constant 2.000000e-01 : f32
    %171 = vector.broadcast %cst_59 : f32 to vector<8x64xf32>
    %172 = arith.mulf %171, %168 : vector<8x64xf32>
    %173 = arith.select %170, %168, %172 : vector<8x64xi1>, vector<8x64xf32>
    %c0_60 = arith.constant 0 : index
    %c0_61 = arith.constant 0 : index
    %174 = vector.load %arg7[%c0_60, %c0_61] : memref<64x128xf32, #tpu.memory_space<vmem>>, vector<64x128xf32>
    %cst_62 = arith.constant dense<0.000000e+00> : vector<8x128xf32>
    %175 = tpu.matmul %173, %174, %cst_62 {dimension_numbers = #tpu.dot_dimension_numbers<[1], [0], [0], [1], [0, 0, 1, 1], [], []>} : vector<8x64xf32>, vector<64x128xf32>, vector<8x128xf32> -> vector<8x128xf32>
    %c0_63 = arith.constant 0 : index
    %c0_64 = arith.constant 0 : index
    %176 = vector.load %arg8[%c0_63, %c0_64] : memref<1x128xf32, #tpu.memory_space<vmem>>, vector<1x128xf32>
    %177 = vector.broadcast %176 : vector<1x128xf32> to vector<8x128xf32>
    %178 = arith.addf %175, %177 : vector<8x128xf32>
    %c0_65 = arith.constant 0 : index
    %c0_66 = arith.constant 0 : index
    %179 = vector.load %arg9[%c0_65, %c0_66] : memref<1x64xf32, #tpu.memory_space<vmem>>, vector<1x64xf32>
    %180 = vector.broadcast %179 : vector<1x64xf32> to vector<8x64xf32>
    %181 = arith.mulf %173, %180 : vector<8x64xf32>
    %cst_67 = arith.constant dense<0.000000e+00> : vector<8xf32>
    %182 = vector.multi_reduction <add>, %181, %cst_67 [1] : vector<8x64xf32> to vector<8xf32>
    %183 = vector.shape_cast %182 : vector<8xf32> to vector<8x1xf32>
    %c0_68 = arith.constant 0 : index
    %c0_69 = arith.constant 0 : index
    %184 = vector.load %arg10[%c0_68, %c0_69] : memref<1x1xf32, #tpu.memory_space<vmem>>, vector<1x1xf32>
    %185 = vector.broadcast %184 : vector<1x1xf32> to vector<8x1xf32>
    %186 = arith.addf %183, %185 : vector<8x1xf32>
    %cst_70 = arith.constant dense<0xFF800000> : vector<8xf32>
    %187 = vector.multi_reduction <maximumf>, %178, %cst_70 [1] : vector<8x128xf32> to vector<8xf32>
    %188 = vector.shape_cast %187 : vector<8xf32> to vector<8x1xf32>
    %189 = tpu.iota {dimensions = array<i32: 1>} : vector<8x128xi32>
    %190 = vector.broadcast %188 : vector<8x1xf32> to vector<8x128xf32>
    %191 = arith.cmpf oeq, %178, %190 : vector<8x128xf32>
    %c128_i32 = arith.constant 128 : i32
    %192 = vector.broadcast %c128_i32 : i32 to vector<8x128xi32>
    %193 = arith.select %191, %189, %192 : vector<8x128xi1>, vector<8x128xi32>
    %cst_71 = arith.constant dense<2147483647> : vector<8xi32>
    %194 = vector.multi_reduction <minsi>, %193, %cst_71 [1] : vector<8x128xi32> to vector<8xi32>
    %195 = vector.shape_cast %194 : vector<8xi32> to vector<8x1xi32>
    %c0_72 = arith.constant 0 : index
    %c0_73 = arith.constant 0 : index
    %196 = vector.load %arg11[%c0_72, %c0_73] : memref<8x1xi32, #tpu.memory_space<vmem>>, vector<8x1xi32>
    tpu.vector_store %arg11[%c0_72, %c0_73], %195 {strides = array<i32>} : memref<8x1xi32, #tpu.memory_space<vmem>>, vector<8x1xi32>,
    %c0_74 = arith.constant 0 : index
    %c0_75 = arith.constant 0 : index
    %197 = vector.load %arg12[%c0_74, %c0_75] : memref<8x1xf32, #tpu.memory_space<vmem>>, vector<8x1xf32>
    tpu.vector_store %arg12[%c0_74, %c0_75], %186 {strides = array<i32>} : memref<8x1xf32, #tpu.memory_space<vmem>>, vector<8x1xf32>,
    return
  }
  func.func @transform_0(%arg0: i32) -> (i32, i32) {
    %c0_i32 = arith.constant 0 : i32
    %c0_i32_0 = arith.constant 0 : i32
    return %arg0, %c0_i32 : i32, i32
  }
  func.func @transform_1(%arg0: i32) -> (i32, i32) {
    %c0_i32 = arith.constant 0 : i32
    %c0_i32_0 = arith.constant 0 : i32
    %c0_i32_1 = arith.constant 0 : i32
    return %c0_i32, %c0_i32_0 : i32, i32
  }
  func.func @transform_2(%arg0: i32) -> (i32, i32, i32) {
    %c0_i32 = arith.constant 0 : i32
    %c0_i32_0 = arith.constant 0 : i32
    %c0_i32_1 = arith.constant 0 : i32
    %c0_i32_2 = arith.constant 0 : i32
    return %c0_i32, %c0_i32_0, %c0_i32_1 : i32, i32, i32
  }
  func.func @transform_3(%arg0: i32) -> (i32, i32) {
    %c0_i32 = arith.constant 0 : i32
    %c0_i32_0 = arith.constant 0 : i32
    %c0_i32_1 = arith.constant 0 : i32
    return %c0_i32, %c0_i32_0 : i32, i32
  }
  func.func @transform_4(%arg0: i32) -> (i32, i32) {
    %c0_i32 = arith.constant 0 : i32
    %c0_i32_0 = arith.constant 0 : i32
    %c0_i32_1 = arith.constant 0 : i32
    return %c0_i32, %c0_i32_0 : i32, i32
  }
  func.func @transform_5(%arg0: i32) -> (i32, i32) {
    %c0_i32 = arith.constant 0 : i32
    %c0_i32_0 = arith.constant 0 : i32
    %c0_i32_1 = arith.constant 0 : i32
    return %c0_i32, %c0_i32_0 : i32, i32
  }
  func.func @transform_6(%arg0: i32) -> (i32, i32) {
    %c0_i32 = arith.constant 0 : i32
    %c0_i32_0 = arith.constant 0 : i32
    %c0_i32_1 = arith.constant 0 : i32
    return %c0_i32, %c0_i32_0 : i32, i32
  }
  func.func @transform_7(%arg0: i32) -> (i32, i32) {
    %c0_i32 = arith.constant 0 : i32
    %c0_i32_0 = arith.constant 0 : i32
    %c0_i32_1 = arith.constant 0 : i32
    return %c0_i32, %c0_i32_0 : i32, i32
  }
  func.func @transform_8(%arg0: i32) -> (i32, i32) {
    %c0_i32 = arith.constant 0 : i32
    %c0_i32_0 = arith.constant 0 : i32
    %c0_i32_1 = arith.constant 0 : i32
    return %c0_i32, %c0_i32_0 : i32, i32
  }
  func.func @transform_9(%arg0: i32) -> (i32, i32) {
    %c0_i32 = arith.constant 0 : i32
    %c0_i32_0 = arith.constant 0 : i32
    %c0_i32_1 = arith.constant 0 : i32
    return %c0_i32, %c0_i32_0 : i32, i32
  }
  func.func @transform_10(%arg0: i32) -> (i32, i32) {
    %c0_i32 = arith.constant 0 : i32
    %c0_i32_0 = arith.constant 0 : i32
    return %arg0, %c0_i32 : i32, i32
  }
  func.func @transform_11(%arg0: i32) -> (i32, i32) {
    %c0_i32 = arith.constant 0 : i32
    %c0_i32_0 = arith.constant 0 : i32
    return %arg0, %c0_i32 : i32, i32
  }
}

</mosaic_0001>

<llo_original>
// kernel: tpu_custom_call.1
$region0: #{tpu_custom_call.1}
  #allocation0 [shape = 'u32[]', space=smem, size = 0x4, offset = 0x4, fixed_abs, tag = 'smem constant byte address 0x4 - core index']
  #allocation1 [shape = 'u32[144,128]{1,0:T(1,128)}', space=vmem, size = 0x12000, scoped, tag = 'internal scratch']
  #allocation2 [shape = 'f32[1,1]{1,0:T(1,128)S(1)}', space=vmem, size = 0x200, scoped, tag = 'scoped memory for tpu_custom_call.1']
  %s0 = inlined_call_operand.hbm [shape: f32[16,32], index: 0, kind: input, shape index: {}]
  %s1 = inlined_call_operand.hbm [shape: f32[32,64], index: 1, kind: input, shape index: {}]
  %s2 = inlined_call_operand.hbm [shape: f32[2,64,64], index: 2, kind: input, shape index: {}]
  %s3 = inlined_call_operand.vmem [shape: f32[3,64], index: 3, kind: input, shape index: {}]
  %s4 = inlined_call_operand.vmem [shape: f32[3,64], index: 4, kind: input, shape index: {}]
  %s5 = inlined_call_operand.vmem [shape: f32[3,64], index: 5, kind: input, shape index: {}]
  %s6 = inlined_call_operand.hbm [shape: f32[64,128], index: 6, kind: input, shape index: {}]
  %s7 = inlined_call_operand.vmem [shape: f32[1,128], index: 7, kind: input, shape index: {}]
  %s8 = inlined_call_operand.vmem [shape: f32[1,64], index: 8, kind: input, shape index: {}]
  %s9 = inlined_call_operand.<no memory space> [shape: f32[1,1], index: 9, kind: input, shape index: {}]
  %s10 = inlined_call_operand.vmem [shape: s32[16,1], index: 10, kind: output, shape index: {0}]
  %s11 = inlined_call_operand.vmem [shape: f32[16,1], index: 11, kind: output, shape index: {1}]
  %12 = xla_tuple %s10, %s11
  %s13 = sld [smem:[#allocation0]]
  $region97: #{tpu_custom_call.1} parent=0
    _
  %s15 = ssub.s32 1, %s13
  %s16 = scalar_select 0, %s15, %s13
  %v17 = vstv %s9
  %18 = vst [vmem:[#allocation2] sm:$0x1] %v17
  $region1: #{tpu_custom_call.1} parent=0
    #allocation3 [shape = 'u8[8192]{0}', space=vmem, size = 0x2000, scoped, tag = 'input window, operand 0']
    #allocation4 [shape = 's32[2]{0}', space=sflag, size = 0x8, scoped, tag = 'scoped memory for tpu_custom_call.1']
    #allocation5 [shape = 'u8[16384]{0}', space=vmem, size = 0x4000, scoped, tag = 'input window, operand 1, single buffered']
    #allocation6 [shape = 's32[1]{0}', space=sflag, size = 0x4, scoped, tag = 'scoped memory for tpu_custom_call.1']
    #allocation7 [shape = 'u8[65536]{0}', space=vmem, size = 0x10000, scoped, tag = 'input window, operand 2, single buffered']
    #allocation8 [shape = 'u8[32768]{0}', space=vmem, size = 0x8000, scoped, tag = 'input window, operand 6, single buffered']
    #allocation9 [shape = 's32[1]{0}', space=sflag, size = 0x4, scoped, tag = 'scoped memory for tpu_custom_call.1']
    %19 = vsyncpa [#allocation4], 0
    %s20 = scalar_lea.sflag [#allocation4], 1
    %21 = vsyncpa %s20, 0
    %22 = vsyncpa [#allocation6], 0
    %23 = vsyncpa [#allocation9], 0
    loop: start=0, step=1, limit=4
    $region2: #{tpu_custom_call.1} parent=1 // loop_pre_header
      _
    $region3: #{tpu_custom_call.1} parent=1 // loop_header
      %s25 = sphi 0, %s29
      %p26 = scmp.ge.s32.totalorder %s25, 4
      %s35 = sphi 0, %s37
      %s38 = sphi 0, %s35
      %s39 = sphi 0, %s38
      %s55 = sphi 0, %s39
      %s59 = sphi 0, %s59
      %s61 = sphi 0, %s59
      %s62 = sphi 0, %s61
      %s76 = sphi 0, %s62
      %s80 = sphi 0, %s80
      %s82 = sphi 0, %s80
      %s83 = sphi 0, %s82
      %s97 = sphi 0, %s83
      %s101 = sphi 0, %s101
      %s103 = sphi 0, %s101
      %s104 = sphi 0, %s103
      %s118 = sphi 0, %s104
      %s122 = sphi 0, %s122
      %s124 = sphi 0, %s122
      %s125 = sphi 0, %s124
      %s139 = sphi 0, %s125
      %s143 = sphi 0, %s143
      %s145 = sphi 0, %s143
      %s146 = sphi 0, %s145
      %s160 = sphi 0, %s146
      %s164 = sphi 0, %s164
      %s166 = sphi 0, %s164
      %s167 = sphi 0, %s166
      %s181 = sphi 0, %s167
      %s185 = sphi 0, %s185
      %s187 = sphi 0, %s185
      %s188 = sphi 0, %s187
      %s202 = sphi 0, %s188
      %s206 = sphi 0, %s206
      %s208 = sphi 0, %s206
      %s209 = sphi 0, %s208
      %s223 = sphi 0, %s209
      %s227 = sphi 0, %s227
      %s229 = sphi 0, %s227
      %s230 = sphi 0, %s229
      %s244 = sphi 0, %s230
      %s250 = sphi 0, %s252
      %s253 = sphi 0, %s250
      %s254 = sphi 0, %s253
      %s270 = sphi 0, %s254
      %s276 = sphi 0, %s278
      %s279 = sphi 0, %s276
      %s280 = sphi 0, %s279
      %s296 = sphi 0, %s280
    $region4: #{tpu_custom_call.1} parent=1 // loop_header_branch
      %28 = sbr.rel (%p26) target = $region8
    $region5: #{tpu_custom_call.1} parent=1 // loop_body
      %s30 = ssub.s32 %s25, 1
      %s31 = ssub.s32 %s25, 2
      %s32 = sadd.s32 %s25, 1
      %s33 = ssub.s32 %s25, %s32
      %p34 = scmp.eq.s32.totalorder %s33, 0
      %s36 = sadd.s32 %s35, 1
      %s37 = scalar_select %p34, %s35, %s36
      %p40 = pneg %p34
      %p41 = scmp.eq.s32.totalorder %s25, 1
      %p42 = por %p40, %p41
      %p43 = scmp.ne.s32.totalorder %s35, %s38
      %p44 = scmp.eq.s32.totalorder %s25, 0
      %p45 = por %p43, %p44
      %p46 = scmp.ne.s32.totalorder %s35, %s38
      %p47 = scmp.eq.s32.totalorder %s30, 1
      %p48 = por %p46, %p47
      %p49 = scmp.ne.s32.totalorder %s38, %s39
      %p50 = scmp.eq.s32.totalorder %s30, 0
      %p51 = por %p49, %p50
      %p52 = scmp.ne.s32.totalorder %s38, %s39
      %p53 = scmp.eq.s32.totalorder %s31, 1
      %p54 = por %p52, %p53
      %p56 = scmp.ne.s32.totalorder %s39, %s55
      %p57 = scmp.eq.s32.totalorder %s31, 0
      %p58 = por %p56, %p57
      %s60 = sadd.s32 %s59, 1
      %p63 = scmp.eq.s32.totalorder %s25, 1
      %p64 = scmp.ne.s32.totalorder %s59, %s61
      %p65 = scmp.eq.s32.totalorder %s25, 0
      %p66 = por %p64, %p65
      %p67 = scmp.ne.s32.totalorder %s59, %s61
      %p68 = scmp.eq.s32.totalorder %s30, 1
      %p69 = por %p67, %p68
      %p70 = scmp.ne.s32.totalorder %s61, %s62
      %p71 = scmp.eq.s32.totalorder %s30, 0
      %p72 = por %p70, %p71
      %p73 = scmp.ne.s32.totalorder %s61, %s62
      %p74 = scmp.eq.s32.totalorder %s31, 1
      %p75 = por %p73, %p74
      %p77 = scmp.ne.s32.totalorder %s62, %s76
      %p78 = scmp.eq.s32.totalorder %s31, 0
      %p79 = por %p77, %p78
      %s81 = sadd.s32 %s80, 1
      %p84 = scmp.eq.s32.totalorder %s25, 1
      %p85 = scmp.ne.s32.totalorder %s80, %s82
      %p86 = scmp.eq.s32.totalorder %s25, 0
      %p87 = por %p85, %p86
      %p88 = scmp.ne.s32.totalorder %s80, %s82
      %p89 = scmp.eq.s32.totalorder %s30, 1
      %p90 = por %p88, %p89
      %p91 = scmp.ne.s32.totalorder %s82, %s83
      %p92 = scmp.eq.s32.totalorder %s30, 0
      %p93 = por %p91, %p92
      %p94 = scmp.ne.s32.totalorder %s82, %s83
      %p95 = scmp.eq.s32.totalorder %s31, 1
      %p96 = por %p94, %p95
      %p98 = scmp.ne.s32.totalorder %s83, %s97
      %p99 = scmp.eq.s32.totalorder %s31, 0
      %p100 = por %p98, %p99
      %s102 = sadd.s32 %s101, 1
      %p105 = scmp.eq.s32.totalorder %s25, 1
      %p106 = scmp.ne.s32.totalorder %s101, %s103
      %p107 = scmp.eq.s32.totalorder %s25, 0
      %p108 = por %p106, %p107
      %p109 = scmp.ne.s32.totalorder %s101, %s103
      %p110 = scmp.eq.s32.totalorder %s30, 1
      %p111 = por %p109, %p110
      %p112 = scmp.ne.s32.totalorder %s103, %s104
      %p113 = scmp.eq.s32.totalorder %s30, 0
      %p114 = por %p112, %p113
      %p115 = scmp.ne.s32.totalorder %s103, %s104
      %p116 = scmp.eq.s32.totalorder %s31, 1
      %p117 = por %p115, %p116
      %p119 = scmp.ne.s32.totalorder %s104, %s118
      %p120 = scmp.eq.s32.totalorder %s31, 0
      %p121 = por %p119, %p120
      %s123 = sadd.s32 %s122, 1
      %p126 = scmp.eq.s32.totalorder %s25, 1
      %p127 = scmp.ne.s32.totalorder %s122, %s124
      %p128 = scmp.eq.s32.totalorder %s25, 0
      %p129 = por %p127, %p128
      %p130 = scmp.ne.s32.totalorder %s122, %s124
      %p131 = scmp.eq.s32.totalorder %s30, 1
      %p132 = por %p130, %p131
      %p133 = scmp.ne.s32.totalorder %s124, %s125
      %p134 = scmp.eq.s32.totalorder %s30, 0
      %p135 = por %p133, %p134
      %p136 = scmp.ne.s32.totalorder %s124, %s125
      %p137 = scmp.eq.s32.totalorder %s31, 1
      %p138 = por %p136, %p137
      %p140 = scmp.ne.s32.totalorder %s125, %s139
      %p141 = scmp.eq.s32.totalorder %s31, 0
      %p142 = por %p140, %p141
      %s144 = sadd.s32 %s143, 1
      %p147 = scmp.eq.s32.totalorder %s25, 1
      %p148 = scmp.ne.s32.totalorder %s143, %s145
      %p149 = scmp.eq.s32.totalorder %s25, 0
      %p150 = por %p148, %p149
      %p151 = scmp.ne.s32.totalorder %s143, %s145
      %p152 = scmp.eq.s32.totalorder %s30, 1
      %p153 = por %p151, %p152
      %p154 = scmp.ne.s32.totalorder %s145, %s146
      %p155 = scmp.eq.s32.totalorder %s30, 0
      %p156 = por %p154, %p155
      %p157 = scmp.ne.s32.totalorder %s145, %s146
      %p158 = scmp.eq.s32.totalorder %s31, 1
      %p159 = por %p157, %p158
      %p161 = scmp.ne.s32.totalorder %s146, %s160
      %p162 = scmp.eq.s32.totalorder %s31, 0
      %p163 = por %p161, %p162
      %s165 = sadd.s32 %s164, 1
      %p168 = scmp.eq.s32.totalorder %s25, 1
      %p169 = scmp.ne.s32.totalorder %s164, %s166
      %p170 = scmp.eq.s32.totalorder %s25, 0
      %p171 = por %p169, %p170
      %p172 = scmp.ne.s32.totalorder %s164, %s166
      %p173 = scmp.eq.s32.totalorder %s30, 1
      %p174 = por %p172, %p173
      %p175 = scmp.ne.s32.totalorder %s166, %s167
      %p176 = scmp.eq.s32.totalorder %s30, 0
      %p177 = por %p175, %p176
      %p178 = scmp.ne.s32.totalorder %s166, %s167
      %p179 = scmp.eq.s32.totalorder %s31, 1
      %p180 = por %p178, %p179
      %p182 = scmp.ne.s32.totalorder %s167, %s181
      %p183 = scmp.eq.s32.totalorder %s31, 0
      %p184 = por %p182, %p183
      %s186 = sadd.s32 %s185, 1
      %p189 = scmp.eq.s32.totalorder %s25, 1
      %p190 = scmp.ne.s32.totalorder %s185, %s187
      %p191 = scmp.eq.s32.totalorder %s25, 0
      %p192 = por %p190, %p191
      %p193 = scmp.ne.s32.totalorder %s185, %s187
      %p194 = scmp.eq.s32.totalorder %s30, 1
      %p195 = por %p193, %p194
      %p196 = scmp.ne.s32.totalorder %s187, %s188
      %p197 = scmp.eq.s32.totalorder %s30, 0
      %p198 = por %p196, %p197
      %p199 = scmp.ne.s32.totalorder %s187, %s188
      %p200 = scmp.eq.s32.totalorder %s31, 1
      %p201 = por %p199, %p200
      %p203 = scmp.ne.s32.totalorder %s188, %s202
      %p204 = scmp.eq.s32.totalorder %s31, 0
      %p205 = por %p203, %p204
      %s207 = sadd.s32 %s206, 1
      %p210 = scmp.eq.s32.totalorder %s25, 1
      %p211 = scmp.ne.s32.totalorder %s206, %s208
      %p212 = scmp.eq.s32.totalorder %s25, 0
      %p213 = por %p211, %p212
      %p214 = scmp.ne.s32.totalorder %s206, %s208
      %p215 = scmp.eq.s32.totalorder %s30, 1
      %p216 = por %p214, %p215
      %p217 = scmp.ne.s32.totalorder %s208, %s209
      %p218 = scmp.eq.s32.totalorder %s30, 0
      %p219 = por %p217, %p218
      %p220 = scmp.ne.s32.totalorder %s208, %s209
      %p221 = scmp.eq.s32.totalorder %s31, 1
      %p222 = por %p220, %p221
      %p224 = scmp.ne.s32.totalorder %s209, %s223
      %p225 = scmp.eq.s32.totalorder %s31, 0
      %p226 = por %p224, %p225
      %s228 = sadd.s32 %s227, 1
      %p231 = scmp.eq.s32.totalorder %s25, 1
      %p232 = scmp.ne.s32.totalorder %s227, %s229
      %p233 = scmp.eq.s32.totalorder %s25, 0
      %p234 = por %p232, %p233
      %p235 = scmp.ne.s32.totalorder %s227, %s229
      %p236 = scmp.eq.s32.totalorder %s30, 1
      %p237 = por %p235, %p236
      %p238 = scmp.ne.s32.totalorder %s229, %s230
      %p239 = scmp.eq.s32.totalorder %s30, 0
      %p240 = por %p238, %p239
      %p241 = scmp.ne.s32.totalorder %s229, %s230
      %p242 = scmp.eq.s32.totalorder %s31, 1
      %p243 = por %p241, %p242
      %p245 = scmp.ne.s32.totalorder %s230, %s244
      %p246 = scmp.eq.s32.totalorder %s31, 0
      %p247 = por %p245, %p246
      %s248 = ssub.s32 %s25, %s32
      %p249 = scmp.eq.s32.totalorder %s248, 0
      %s251 = sadd.s32 %s250, 1
      %s252 = scalar_select %p249, %s250, %s251
      %p255 = pneg %p249
      %p256 = scmp.eq.s32.totalorder %s25, 1
      %p257 = por %p255, %p256
      %p258 = scmp.ne.s32.totalorder %s250, %s253
      %p259 = scmp.eq.s32.totalorder %s25, 0
      %p260 = por %p258, %p259
      %p261 = scmp.ne.s32.totalorder %s250, %s253
      %p262 = scmp.eq.s32.totalorder %s30, 1
      %p263 = por %p261, %p262
      %p264 = scmp.ne.s32.totalorder %s253, %s254
      %p265 = scmp.eq.s32.totalorder %s30, 0
      %p266 = por %p264, %p265
      %p267 = scmp.ne.s32.totalorder %s253, %s254
      %p268 = scmp.eq.s32.totalorder %s31, 1
      %p269 = por %p267, %p268
      %p271 = scmp.ne.s32.totalorder %s254, %s270
      %p272 = scmp.eq.s32.totalorder %s31, 0
      %p273 = por %p271, %p272
      %s274 = ssub.s32 %s25, %s32
      %p275 = scmp.eq.s32.totalorder %s274, 0
      %s277 = sadd.s32 %s276, 1
      %s278 = scalar_select %p275, %s276, %s277
      %p281 = pneg %p275
      %p282 = scmp.eq.s32.totalorder %s25, 1
      %p283 = por %p281, %p282
      %p284 = scmp.ne.s32.totalorder %s276, %s279
      %p285 = scmp.eq.s32.totalorder %s25, 0
      %p286 = por %p284, %p285
      %p287 = scmp.ne.s32.totalorder %s276, %s279
      %p288 = scmp.eq.s32.totalorder %s30, 1
      %p289 = por %p287, %p288
      %p290 = scmp.ne.s32.totalorder %s279, %s280
      %p291 = scmp.eq.s32.totalorder %s30, 0
      %p292 = por %p290, %p291
      %p293 = scmp.ne.s32.totalorder %s279, %s280
      %p294 = scmp.eq.s32.totalorder %s31, 1
      %p295 = por %p293, %p294
      %p297 = scmp.ne.s32.totalorder %s280, %s296
      %p298 = scmp.eq.s32.totalorder %s31, 0
      %p299 = por %p297, %p298
      %p300 = scmp.le.s32.totalorder 1, %s25
      %p301 = scmp.lt.s32.totalorder %s25, 3
      %p302 = pnand %p300, %p301
      %p303 = pneg %p302
      // Predicated region
      $region9: #{tpu_custom_call.1} parent=5 // pred_check
        _
      $region10: #{tpu_custom_call.1} parent=5 // pred_check_branch
        %305 = sbr.rel (%p302) target = $region12
      $region11: #{tpu_custom_call.1} parent=5 // pred_region
        %s306 = ssub.s32 %s25, 1
        // Predicated region
        $region13: #{tpu_custom_call.1} parent=11 // pred_check
          %p307 = pneg %p72
        $region14: #{tpu_custom_call.1} parent=11 // pred_check_branch
          %309 = sbr.rel (%p307) target = $region16
        $region15: #{tpu_custom_call.1} parent=11 // pred_region
          %s311 = ssub.s32 512, 512
          %312 = vsyncadd [#allocation6], %s311
          %s313 = sshll.u32 [#allocation5], 4
          %s314 = int_to_ptr.vmem [resolvable:$true] %s313
          %319 = dma.hbm_to_vmem [thread:$0]  %s1, 512, %s314, [#allocation6], 128, 128, 8
        $region16: #{tpu_custom_call.1} parent=11 // pred_fallthru
          _
        // Predicated region
        $region17: #{tpu_custom_call.1} parent=11 // pred_check
          %p320 = pneg %p93
        $region18: #{tpu_custom_call.1} parent=11 // pred_check_branch
          %322 = sbr.rel (%p320) target = $region20
        $region19: #{tpu_custom_call.1} parent=11 // pred_region
          %s324 = ssub.s32 2048, 2048
          %325 = vsyncadd [#allocation6], %s324
          %s326 = sshll.u32 [#allocation7], 4
          %s327 = int_to_ptr.vmem [resolvable:$true] %s326
          %332 = dma.hbm_to_vmem [thread:$0]  %s2, 2048, %s327, [#allocation6], 128, 128, 8
        $region20: #{tpu_custom_call.1} parent=11 // pred_fallthru
          _
        // Predicated region
        $region21: #{tpu_custom_call.1} parent=11 // pred_check
          %p333 = pneg %p114
        $region22: #{tpu_custom_call.1} parent=11 // pred_check_branch
          %335 = sbr.rel (%p333) target = $region24
        $region23: #{tpu_custom_call.1} parent=11 // pred_region
          _
        $region24: #{tpu_custom_call.1} parent=11 // pred_fallthru
          _
        // Predicated region
        $region25: #{tpu_custom_call.1} parent=11 // pred_check
          %p336 = pneg %p135
        $region26: #{tpu_custom_call.1} parent=11 // pred_check_branch
          %338 = sbr.rel (%p336) target = $region28
        $region27: #{tpu_custom_call.1} parent=11 // pred_region
          _
        $region28: #{tpu_custom_call.1} parent=11 // pred_fallthru
          _
        // Predicated region
        $region29: #{tpu_custom_call.1} parent=11 // pred_check
          %p339 = pneg %p156
        $region30: #{tpu_custom_call.1} parent=11 // pred_check_branch
          %341 = sbr.rel (%p339) target = $region32
        $region31: #{tpu_custom_call.1} parent=11 // pred_region
          _
        $region32: #{tpu_custom_call.1} parent=11 // pred_fallthru
          _
        // Predicated region
        $region33: #{tpu_custom_call.1} parent=11 // pred_check
          %p342 = pneg %p177
        $region34: #{tpu_custom_call.1} parent=11 // pred_check_branch
          %344 = sbr.rel (%p342) target = $region36
        $region35: #{tpu_custom_call.1} parent=11 // pred_region
          %s346 = ssub.s32 1024, 1024
          %347 = vsyncadd [#allocation9], %s346
          %s348 = sshll.u32 [#allocation8], 4
          %s349 = int_to_ptr.vmem [resolvable:$true] %s348
          %354 = dma.hbm_to_vmem [thread:$0]  %s6, 1024, %s349, [#allocation9], 128, 128, 8
        $region36: #{tpu_custom_call.1} parent=11 // pred_fallthru
          _
        // Predicated region
        $region37: #{tpu_custom_call.1} parent=11 // pred_check
          %p355 = pneg %p198
        $region38: #{tpu_custom_call.1} parent=11 // pred_check_branch
          %357 = sbr.rel (%p355) target = $region40
        $region39: #{tpu_custom_call.1} parent=11 // pred_region
          _
        $region40: #{tpu_custom_call.1} parent=11 // pred_fallthru
          _
        // Predicated region
        $region41: #{tpu_custom_call.1} parent=11 // pred_check
          %p358 = pneg %p219
        $region42: #{tpu_custom_call.1} parent=11 // pred_check_branch
          %360 = sbr.rel (%p358) target = $region44
        $region43: #{tpu_custom_call.1} parent=11 // pred_region
          _
        $region44: #{tpu_custom_call.1} parent=11 // pred_fallthru
          _
        // Predicated region
        $region45: #{tpu_custom_call.1} parent=11 // pred_check
          %p361 = pneg %p240
        $region46: #{tpu_custom_call.1} parent=11 // pred_check_branch
          %363 = sbr.rel (%p361) target = $region48
        $region47: #{tpu_custom_call.1} parent=11 // pred_region
          _
        $region48: #{tpu_custom_call.1} parent=11 // pred_fallthru
          _
      $region12: #{tpu_custom_call.1} parent=5 // pred_fallthru
        _
      %p364 = scmp.lt.s32.totalorder %s25, 2
      // Predicated region
      $region49: #{tpu_custom_call.1} parent=5 // pred_check
        %p365 = pneg %p364
      $region50: #{tpu_custom_call.1} parent=5 // pred_check_branch
        %367 = sbr.rel (%p365) target = $region52
      $region51: #{tpu_custom_call.1} parent=5 // pred_region
        // Predicated region
        $region53: #{tpu_custom_call.1} parent=51 // pred_check
          %p368 = pneg %p45
        $region54: #{tpu_custom_call.1} parent=51 // pred_check_branch
          %370 = sbr.rel (%p368) target = $region56
        $region55: #{tpu_custom_call.1} parent=51 // pred_region
          %s371 = sand.u32 %s35, 1
          %s372 = scalar_lea.sflag [#allocation4], %s371
          %s373 = sand.u32 %s35, 1
          %s374 = smul.addr %s373, 8
          %s375 = scalar_lea.vmem [#allocation3], %s374
          %s377 = ssub.s32 128, 128
          %378 = vsyncadd %s372, %s377
          %s379 = smul.addr %s25, 128
          %s380 = scalar_lea.hbm %s0, %s379
          %s382 = sshll.u32 %s375, 4
          %s383 = int_to_ptr.vmem [resolvable:$true] %s382
          %385 = dma.hbm_to_vmem [thread:$0]  %s380, 128, %s383, %s372
        $region56: #{tpu_custom_call.1} parent=51 // pred_fallthru
          _
      $region52: #{tpu_custom_call.1} parent=5 // pred_fallthru
        _
      %p386 = scmp.le.s32.totalorder 1, %s25
      %p387 = scmp.lt.s32.totalorder %s25, 3
      %p388 = pnand %p386, %p387
      %p389 = pneg %p388
      // Predicated region
      $region57: #{tpu_custom_call.1} parent=5 // pred_check
        _
      $region58: #{tpu_custom_call.1} parent=5 // pred_check_branch
        %391 = sbr.rel (%p388) target = $region60
      $region59: #{tpu_custom_call.1} parent=5 // pred_region
        %s392 = ssub.s32 %s25, 1
        %s393 = sand.u32 %s38, 1
        %s394 = scalar_lea.sflag [#allocation4], %s393
        %s395 = sand.u32 %s38, 1
        %s396 = smul.addr %s395, 8
        %s397 = scalar_lea.vmem [#allocation3], %s396
        // Predicated region
        $region61: #{tpu_custom_call.1} parent=59 // pred_check
          %p398 = pneg %p51
        $region62: #{tpu_custom_call.1} parent=59 // pred_check_branch
          %400 = sbr.rel (%p398) target = $region64
        $region63: #{tpu_custom_call.1} parent=59 // pred_region
          %401 = dma.done %s394, 128
        $region64: #{tpu_custom_call.1} parent=59 // pred_fallthru
          _
        // Predicated region
        $region65: #{tpu_custom_call.1} parent=59 // pred_check
          %p402 = pneg %p72
        $region66: #{tpu_custom_call.1} parent=59 // pred_check_branch
          %404 = sbr.rel (%p402) target = $region68
        $region67: #{tpu_custom_call.1} parent=59 // pred_region
          %405 = dma.done [#allocation6], 512
        $region68: #{tpu_custom_call.1} parent=59 // pred_fallthru
          _
        // Predicated region
        $region69: #{tpu_custom_call.1} parent=59 // pred_check
          %p406 = pneg %p93
        $region70: #{tpu_custom_call.1} parent=59 // pred_check_branch
          %408 = sbr.rel (%p406) target = $region72
        $region71: #{tpu_custom_call.1} parent=59 // pred_region
          %409 = dma.done [#allocation6], 2048
        $region72: #{tpu_custom_call.1} parent=59 // pred_fallthru
          _
        // Predicated region
        $region73: #{tpu_custom_call.1} parent=59 // pred_check
          %p410 = pneg %p177
        $region74: #{tpu_custom_call.1} parent=59 // pred_check_branch
          %412 = sbr.rel (%p410) target = $region76
        $region75: #{tpu_custom_call.1} parent=59 // pred_region
          %413 = dma.done [#allocation9], 1024
        $region76: #{tpu_custom_call.1} parent=59 // pred_fallthru
          _
        %s414 = sand.u32 %s38, 1
        %s415 = scalar_lea.sflag [#allocation4], %s414
        %s416 = sand.u32 %s38, 1
        %s417 = smul.addr %s416, 8
        %s418 = scalar_lea.vmem [#allocation3], %s417
        %p419 = pneg %p51
        %p420 = pneg %p48
        %p421 = pneg %p72
        %p422 = pneg %p69
        %p423 = pneg %p93
        %p424 = pneg %p90
        %p425 = pneg %p114
        %p426 = pneg %p111
        %p427 = pneg %p135
        %p428 = pneg %p132
        %p429 = pneg %p156
        %p430 = pneg %p153
        %p431 = pneg %p177
        %p432 = pneg %p174
        %p433 = pneg %p198
        %p434 = pneg %p195
        %p435 = pneg %p219
        %p436 = pneg %p216
        %p437 = pneg %p240
        %p438 = pneg %p237
        %p439 = pneg %p266
        %p440 = pneg %p263
        %p441 = scmp.lt.s32.totalorder %s30, 1
        %s442 = scalar_select %p441, %s30, 1
        %s443 = smul.addr %s442, 8
        %s444 = scalar_lea.vmem %s10, %s443
        %p445 = pneg %p292
        %p446 = pneg %p289
        %p447 = scmp.lt.s32.totalorder %s30, 1
        %s448 = scalar_select %p447, %s30, 1
        %s449 = smul.addr %s448, 8
        %s450 = scalar_lea.vmem %s11, %s449
        %p451 = scmp.lt.s32.totalorder %s30, 1
        %s452 = scalar_select %p451, %s30, 1
        %s453 = smul.addr %s452, 8
        %s454 = scalar_lea.vmem %s10, %s453
        %p455 = scmp.lt.s32.totalorder %s30, 1
        %s456 = scalar_select %p455, %s30, 1
        %s457 = smul.addr %s456, 8
        %s458 = scalar_lea.vmem %s11, %s457
        %v459 = vld [vmem:[%s397] sm:$0xff]
        %v460 = vlaneseq
        %v461 = vand.u32 %v460, 127
        %vm462 = vcmp.lt.s32.totalorder %v461, 32
        %v463 = vld [vmem:[#allocation5] sm:$0xff]
        %v464 = vld [vmem:[#allocation5 + $0x8] sm:$0xff]
        %v465 = vld [vmem:[#allocation5 + $0x10] sm:$0xff]
        %v466 = vld [vmem:[#allocation5 + $0x18] sm:$0xff]
        %v467 = vld [vmem:[%s3] sm:$0x1]
        %v468 = vlaneseq
        %v469 = vshrl.u32 %v468, 7
        %v470 = vsub.s32 0, %v469
        %v471 = vrot.slane %v467, %v470
        %vm472 = vcmask 261120
        %v474 = vsel %vm472, %v459, 0
        %476 = vmatprep.subr.mxu0 0.0
        %477 = vmatpush1.msra.mxu0 %v463
        %478 = vmatprep.subr.mxu0 0.0
        %479 = vmatpush1.msra.mxu0 %v464
        %480 = vmatprep.subr.mxu0 0.0
        %481 = vmatpush1.msra.mxu0 %v465
        %482 = vmatprep.subr.mxu0 0.0
        %483 = vmatpush1.msra.mxu0 %v466
        %484 = vmatprep.subr.mxu0 0.0
        %485 = vmatpush1.msra.mxu0 0.0
        %486 = vmatprep.subr.mxu0 0.0
        %487 = vmatpush1.msra.mxu0 0.0
        %488 = vmatprep.subr.mxu0 0.0
        %489 = vmatpush1.msra.mxu0 0.0
        %490 = vmatprep.subr.mxu0 0.0
        %491 = vmatpush1.msra.mxu0 0.0
        %492 = vmatprep.subr.mxu0 0.0
        %493 = vmatpush1.msra.mxu0 0.0
        %494 = vmatprep.subr.mxu0 0.0
        %495 = vmatpush1.msra.mxu0 0.0
        %496 = vmatprep.subr.mxu0 0.0
        %497 = vmatpush1.msra.mxu0 0.0
        %498 = vmatprep.subr.mxu0 0.0
        %499 = vmatpush1.msra.mxu0 0.0
        %500 = vmatprep.subr.mxu0 0.0
        %501 = vmatpush1.msra.mxu0 0.0
        %502 = vmatprep.subr.mxu0 0.0
        %503 = vmatpush1.msra.mxu0 0.0
        %504 = vmatprep.subr.mxu0 0.0
        %505 = vmatpush1.msra.mxu0 0.0
        %506 = vmatprep.subr.mxu0 0.0
        %507 = vmatpush1.msra.mxu0 0.0
        %508 = vmatprep.subr.mxu0 0.0
        %509 = vmatpush1.msra.mxu0 0.0
        %510 = vmatprep.subr.mxu0 0.0
        %511 = vmatpush1.msra.mxu0 0.0
        %512 = vmatprep.subr.mxu0 0.0
        %513 = vmatpush1.msra.mxu0 0.0
        %514 = vmatprep.subr.mxu0 0.0
        %515 = vmatpush1.msra.mxu0 0.0
        %516 = vmatprep.subr.mxu0 0.0
        %517 = vmatpush1.msra.mxu0 0.0
        %518 = vmatprep.subr.mxu0 0.0
        %519 = vmatpush1.msra.mxu0 0.0
        %520 = vmatprep.subr.mxu0 0.0
        %521 = vmatpush1.msra.mxu0 0.0
        %522 = vmatprep.subr.mxu0 0.0
        %523 = vmatpush1.msra.mxu0 0.0
        %524 = vmatprep.subr.mxu0 0.0
        %525 = vmatpush1.msra.mxu0 0.0
        %526 = vmatprep.subr.mxu0 0.0
        %527 = vmatpush1.msra.mxu0 0.0
        %528 = vmatprep.subr.mxu0 0.0
        %529 = vmatpush1.msra.mxu0 0.0
        %530 = vmatprep.subr.mxu0 0.0
        %531 = vmatpush1.msra.mxu0 0.0
        %532 = vmatprep.subr.mxu0 0.0
        %533 = vmatpush1.msra.mxu0 0.0
        %534 = vmatprep.subr.mxu0 0.0
        %535 = vmatpush1.msra.mxu0 0.0
        %536 = vmatprep.subr.mxu0 0.0
        %537 = vmatpush1.msra.mxu0 0.0
        %538 = vmatprep.subr.mxu0 0.0
        %539 = vmatpush1.msra.mxu0 0.0
        %540 = vmatprep.mubr.f32.mxu0 0.0
        %541 = vmatmul.mubr.f32.gmra.mrb[0].mxu0 %v474
        %v542 = vpop.f32.mrb[0].mxu0
        %v543 = vadd.f32 %v471, %v542
        %v544 = vpop.f32.mrb[0].mxu0
        %545 = vdwg.mxu0
        %v546 = vsel %vm462, %v543, 0.0
        %vm547 = vcmask 523264
        %v548 = vsel %vm547, %v546, 0.0
        %549 = vadd.xlane.f32.xlu0 %v548
        %v550 = vpop.xlane.xlu0 %549
        %v551 = vsel %vm547, %v543, 0.0
        %552 = vadd.xlane.f32.xlu0 %v551
        %v553 = vpop.xlane.xlu0 %552
        %v554 = vsub.f32 %v553, %v550
        %v555 = vsel %vm462, %v550, %v554
        %v556 = vmul.f32 %v555, 0.03125
        %v557 = vsub.f32 %v543, %v556
        %v558 = vmul.f32 %v557, %v557
        %v559 = vsel %vm462, %v558, 0.0
        %v560 = vsel %vm547, %v559, 0.0
        %561 = vadd.xlane.f32.xlu0 %v560
        %v562 = vpop.xlane.xlu0 %561
        %v563 = vsel %vm547, %v558, 0.0
        %564 = vadd.xlane.f32.xlu0 %v563
        %v565 = vpop.xlane.xlu0 %564
        %v566 = vsub.f32 %v565, %v562
        %v567 = vsel %vm462, %v562, %v566
        %v568 = vmul.f32 %v567, 0.03125
        %v569 = vadd.f32 %v568, 1e-05
        %v570 = vrsqrt.pop %v569
        %v571 = vmul.f32 %v557, %v570
        %v572 = vld [vmem:[%s4] sm:$0x1]
        %v573 = vlaneseq
        %v574 = vshrl.u32 %v573, 7
        %v575 = vsub.s32 0, %v574
        %v576 = vrot.slane %v572, %v575
        %v577 = vmul.f32 %v571, %v576
        %v578 = vld [vmem:[%s5] sm:$0x1]
        %v579 = vlaneseq
        %v580 = vshrl.u32 %v579, 7
        %v581 = vsub.s32 0, %v580
        %v582 = vrot.slane %v578, %v581
        %v583 = vadd.f32 %v577, %v582
        %vm584 = vcmp.gt.f32.partialorder %v583, 0.0
        %v585 = vmul.f32 %v583, 0.2
        %v586 = vsel %vm584, %v583, %v585
        %v587 = vld [vmem:[#allocation7] sm:$0xff]
        %v588 = vld [vmem:[#allocation7 + $0x8] sm:$0xff]
        %v589 = vld [vmem:[#allocation7 + $0x10] sm:$0xff]
        %v590 = vld [vmem:[#allocation7 + $0x18] sm:$0xff]
        %v591 = vld [vmem:[#allocation7 + $0x20] sm:$0xff]
        %v592 = vld [vmem:[#allocation7 + $0x28] sm:$0xff]
        %v593 = vld [vmem:[#allocation7 + $0x30] sm:$0xff]
        %v594 = vld [vmem:[#allocation7 + $0x38] sm:$0xff]
        %v595 = vld [vmem:[%s3 + $0x1] sm:$0x1]
        %v596 = vlaneseq
        %v597 = vshrl.u32 %v596, 7
        %v598 = vsub.s32 0, %v597
        %v599 = vrot.slane %v595, %v598
        %v601 = vsel %vm547, %v586, 0
        %603 = vmatprep.subr.mxu0 0.0
        %604 = vmatpush1.msra.mxu0 %v587
        %605 = vmatprep.subr.mxu0 0.0
        %606 = vmatpush1.msra.mxu0 %v588
        %607 = vmatprep.subr.mxu0 0.0
        %608 = vmatpush1.msra.mxu0 %v589
        %609 = vmatprep.subr.mxu0 0.0
        %610 = vmatpush1.msra.mxu0 %v590
        %611 = vmatprep.subr.mxu0 0.0
        %612 = vmatpush1.msra.mxu0 %v591
        %613 = vmatprep.subr.mxu0 0.0
        %614 = vmatpush1.msra.mxu0 %v592
        %615 = vmatprep.subr.mxu0 0.0
        %616 = vmatpush1.msra.mxu0 %v593
        %617 = vmatprep.subr.mxu0 0.0
        %618 = vmatpush1.msra.mxu0 %v594
        %619 = vmatprep.subr.mxu0 0.0
        %620 = vmatpush1.msra.mxu0 0.0
        %621 = vmatprep.subr.mxu0 0.0
        %622 = vmatpush1.msra.mxu0 0.0
        %623 = vmatprep.subr.mxu0 0.0
        %624 = vmatpush1.msra.mxu0 0.0
        %625 = vmatprep.subr.mxu0 0.0
        %626 = vmatpush1.msra.mxu0 0.0
        %627 = vmatprep.subr.mxu0 0.0
        %628 = vmatpush1.msra.mxu0 0.0
        %629 = vmatprep.subr.mxu0 0.0
        %630 = vmatpush1.msra.mxu0 0.0
        %631 = vmatprep.subr.mxu0 0.0
        %632 = vmatpush1.msra.mxu0 0.0
        %633 = vmatprep.subr.mxu0 0.0
        %634 = vmatpush1.msra.mxu0 0.0
        %635 = vmatprep.subr.mxu0 0.0
        %636 = vmatpush1.msra.mxu0 0.0
        %637 = vmatprep.subr.mxu0 0.0
        %638 = vmatpush1.msra.mxu0 0.0
        %639 = vmatprep.subr.mxu0 0.0
        %640 = vmatpush1.msra.mxu0 0.0
        %641 = vmatprep.subr.mxu0 0.0
        %642 = vmatpush1.msra.mxu0 0.0
        %643 = vmatprep.subr.mxu0 0.0
        %644 = vmatpush1.msra.mxu0 0.0
        %645 = vmatprep.subr.mxu0 0.0
        %646 = vmatpush1.msra.mxu0 0.0
        %647 = vmatprep.subr.mxu0 0.0
        %648 = vmatpush1.msra.mxu0 0.0
        %649 = vmatprep.subr.mxu0 0.0
        %650 = vmatpush1.msra.mxu0 0.0
        %651 = vmatprep.subr.mxu0 0.0
        %652 = vmatpush1.msra.mxu0 0.0
        %653 = vmatprep.subr.mxu0 0.0
        %654 = vmatpush1.msra.mxu0 0.0
        %655 = vmatprep.subr.mxu0 0.0
        %656 = vmatpush1.msra.mxu0 0.0
        %657 = vmatprep.subr.mxu0 0.0
        %658 = vmatpush1.msra.mxu0 0.0
        %659 = vmatprep.subr.mxu0 0.0
        %660 = vmatpush1.msra.mxu0 0.0
        %661 = vmatprep.subr.mxu0 0.0
        %662 = vmatpush1.msra.mxu0 0.0
        %663 = vmatprep.subr.mxu0 0.0
        %664 = vmatpush1.msra.mxu0 0.0
        %665 = vmatprep.subr.mxu0 0.0
        %666 = vmatpush1.msra.mxu0 0.0
        %667 = vmatprep.mubr.f32.mxu0 0.0
        %668 = vmatmul.mubr.f32.gmra.mrb[0].mxu0 %v601
        %v669 = vpop.f32.mrb[0].mxu0
        %v670 = vadd.f32 %v599, %v669
        %v671 = vpop.f32.mrb[0].mxu0
        %672 = vdwg.mxu0
        %v673 = vsel %vm462, %v670, 0.0
        %v674 = vsel %vm547, %v673, 0.0
        %675 = vadd.xlane.f32.xlu0 %v674
        %v676 = vpop.xlane.xlu0 %675
        %v677 = vsel %vm547, %v670, 0.0
        %678 = vadd.xlane.f32.xlu0 %v677
        %v679 = vpop.xlane.xlu0 %678
        %v680 = vsub.f32 %v679, %v676
        %v681 = vsel %vm462, %v676, %v680
        %v682 = vmul.f32 %v681, 0.03125
        %v683 = vsub.f32 %v670, %v682
        %v684 = vmul.f32 %v683, %v683
        %v685 = vsel %vm462, %v684, 0.0
        %v686 = vsel %vm547, %v685, 0.0
        %687 = vadd.xlane.f32.xlu0 %v686
        %v688 = vpop.xlane.xlu0 %687
        %v689 = vsel %vm547, %v684, 0.0
        %690 = vadd.xlane.f32.xlu0 %v689
        %v691 = vpop.xlane.xlu0 %690
        %v692 = vsub.f32 %v691, %v688
        %v693 = vsel %vm462, %v688, %v692
        %v694 = vmul.f32 %v693, 0.03125
        %v695 = vadd.f32 %v694, 1e-05
        %v696 = vrsqrt.pop %v695
        %v697 = vmul.f32 %v683, %v696
        %v698 = vld [vmem:[%s4 + $0x1] sm:$0x1]
        %v699 = vlaneseq
        %v700 = vshrl.u32 %v699, 7
        %v701 = vsub.s32 0, %v700
        %v702 = vrot.slane %v698, %v701
        %v703 = vmul.f32 %v697, %v702
        %v704 = vld [vmem:[%s5 + $0x1] sm:$0x1]
        %v705 = vlaneseq
        %v706 = vshrl.u32 %v705, 7
        %v707 = vsub.s32 0, %v706
        %v708 = vrot.slane %v704, %v707
        %v709 = vadd.f32 %v703, %v708
        %vm710 = vcmp.gt.f32.partialorder %v709, 0.0
        %v711 = vmul.f32 %v709, 0.2
        %v712 = vsel %vm710, %v709, %v711
        %s713 = scalar_lea.vmem [#allocation7], 64
        %v714 = vld [vmem:[%s713] sm:$0xff]
        %v715 = vld [vmem:[%s713 + $0x8] sm:$0xff]
        %v716 = vld [vmem:[%s713 + $0x10] sm:$0xff]
        %v717 = vld [vmem:[%s713 + $0x18] sm:$0xff]
        %v718 = vld [vmem:[%s713 + $0x20] sm:$0xff]
        %v719 = vld [vmem:[%s713 + $0x28] sm:$0xff]
        %v720 = vld [vmem:[%s713 + $0x30] sm:$0xff]
        %v721 = vld [vmem:[%s713 + $0x38] sm:$0xff]
        %v722 = vld [vmem:[%s3 + $0x2] sm:$0x1]
        %v723 = vlaneseq
        %v724 = vshrl.u32 %v723, 7
        %v725 = vsub.s32 0, %v724
        %v726 = vrot.slane %v722, %v725
        %v728 = vsel %vm547, %v712, 0
        %730 = vmatprep.subr.mxu0 0.0
        %731 = vmatpush1.msra.mxu0 %v714
        %732 = vmatprep.subr.mxu0 0.0
        %733 = vmatpush1.msra.mxu0 %v715
        %734 = vmatprep.subr.mxu0 0.0
        %735 = vmatpush1.msra.mxu0 %v716
        %736 = vmatprep.subr.mxu0 0.0
        %737 = vmatpush1.msra.mxu0 %v717
        %738 = vmatprep.subr.mxu0 0.0
        %739 = vmatpush1.msra.mxu0 %v718
        %740 = vmatprep.subr.mxu0 0.0
        %741 = vmatpush1.msra.mxu0 %v719
        %742 = vmatprep.subr.mxu0 0.0
        %743 = vmatpush1.msra.mxu0 %v720
        %744 = vmatprep.subr.mxu0 0.0
        %745 = vmatpush1.msra.mxu0 %v721
        %746 = vmatprep.subr.mxu0 0.0
        %747 = vmatpush1.msra.mxu0 0.0
        %748 = vmatprep.subr.mxu0 0.0
        %749 = vmatpush1.msra.mxu0 0.0
        %750 = vmatprep.subr.mxu0 0.0
        %751 = vmatpush1.msra.mxu0 0.0
        %752 = vmatprep.subr.mxu0 0.0
        %753 = vmatpush1.msra.mxu0 0.0
        %754 = vmatprep.subr.mxu0 0.0
        %755 = vmatpush1.msra.mxu0 0.0
        %756 = vmatprep.subr.mxu0 0.0
        %757 = vmatpush1.msra.mxu0 0.0
        %758 = vmatprep.subr.mxu0 0.0
        %759 = vmatpush1.msra.mxu0 0.0
        %760 = vmatprep.subr.mxu0 0.0
        %761 = vmatpush1.msra.mxu0 0.0
        %762 = vmatprep.subr.mxu0 0.0
        %763 = vmatpush1.msra.mxu0 0.0
        %764 = vmatprep.subr.mxu0 0.0
        %765 = vmatpush1.msra.mxu0 0.0
        %766 = vmatprep.subr.mxu0 0.0
        %767 = vmatpush1.msra.mxu0 0.0
        %768 = vmatprep.subr.mxu0 0.0
        %769 = vmatpush1.msra.mxu0 0.0
        %770 = vmatprep.subr.mxu0 0.0
        %771 = vmatpush1.msra.mxu0 0.0
        %772 = vmatprep.subr.mxu0 0.0
        %773 = vmatpush1.msra.mxu0 0.0
        %774 = vmatprep.subr.mxu0 0.0
        %775 = vmatpush1.msra.mxu0 0.0
        %776 = vmatprep.subr.mxu0 0.0
        %777 = vmatpush1.msra.mxu0 0.0
        %778 = vmatprep.subr.mxu0 0.0
        %779 = vmatpush1.msra.mxu0 0.0
        %780 = vmatprep.subr.mxu0 0.0
        %781 = vmatpush1.msra.mxu0 0.0
        %782 = vmatprep.subr.mxu0 0.0
        %783 = vmatpush1.msra.mxu0 0.0
        %784 = vmatprep.subr.mxu0 0.0
        %785 = vmatpush1.msra.mxu0 0.0
        %786 = vmatprep.subr.mxu0 0.0
        %787 = vmatpush1.msra.mxu0 0.0
        %788 = vmatprep.subr.mxu0 0.0
        %789 = vmatpush1.msra.mxu0 0.0
        %790 = vmatprep.subr.mxu0 0.0
        %791 = vmatpush1.msra.mxu0 0.0
        %792 = vmatprep.subr.mxu0 0.0
        %793 = vmatpush1.msra.mxu0 0.0
        %794 = vmatprep.mubr.f32.mxu0 0.0
        %795 = vmatmul.mubr.f32.gmra.mrb[0].mxu0 %v728
        %v796 = vpop.f32.mrb[0].mxu0
        %v797 = vadd.f32 %v726, %v796
        %v798 = vpop.f32.mrb[0].mxu0
        %799 = vdwg.mxu0
        %v800 = vsel %vm462, %v797, 0.0
        %v801 = vsel %vm547, %v800, 0.0
        %802 = vadd.xlane.f32.xlu0 %v801
        %v803 = vpop.xlane.xlu0 %802
        %v804 = vsel %vm547, %v797, 0.0
        %805 = vadd.xlane.f32.xlu0 %v804
        %v806 = vpop.xlane.xlu0 %805
        %v807 = vsub.f32 %v806, %v803
        %v808 = vsel %vm462, %v803, %v807
        %v809 = vmul.f32 %v808, 0.03125
        %v810 = vsub.f32 %v797, %v809
        %v811 = vmul.f32 %v810, %v810
        %v812 = vsel %vm462, %v811, 0.0
        %v813 = vsel %vm547, %v812, 0.0
        %814 = vadd.xlane.f32.xlu0 %v813
        %v815 = vpop.xlane.xlu0 %814
        %v816 = vsel %vm547, %v811, 0.0
        %817 = vadd.xlane.f32.xlu0 %v816
        %v818 = vpop.xlane.xlu0 %817
        %v819 = vsub.f32 %v818, %v815
        %v820 = vsel %vm462, %v815, %v819
        %v821 = vmul.f32 %v820, 0.03125
        %v822 = vadd.f32 %v821, 1e-05
        %v823 = vrsqrt.pop %v822
        %v824 = vmul.f32 %v810, %v823
        %v825 = vld [vmem:[%s4 + $0x2] sm:$0x1]
        %v826 = vlaneseq
        %v827 = vshrl.u32 %v826, 7
        %v828 = vsub.s32 0, %v827
        %v829 = vrot.slane %v825, %v828
        %v830 = vmul.f32 %v824, %v829
        %v831 = vld [vmem:[%s5 + $0x2] sm:$0x1]
        %v832 = vlaneseq
        %v833 = vshrl.u32 %v832, 7
        %v834 = vsub.s32 0, %v833
        %v835 = vrot.slane %v831, %v834
        %v836 = vadd.f32 %v830, %v835
        %vm837 = vcmp.gt.f32.partialorder %v836, 0.0
        %v838 = vmul.f32 %v836, 0.2
        %v839 = vsel %vm837, %v836, %v838
        %v840 = vld [vmem:[#allocation8] sm:$0xff]
        %v841 = vld [vmem:[#allocation8 + $0x8] sm:$0xff]
        %v842 = vld [vmem:[#allocation8 + $0x10] sm:$0xff]
        %v843 = vld [vmem:[#allocation8 + $0x18] sm:$0xff]
        %v844 = vld [vmem:[#allocation8 + $0x20] sm:$0xff]
        %v845 = vld [vmem:[#allocation8 + $0x28] sm:$0xff]
        %v846 = vld [vmem:[#allocation8 + $0x30] sm:$0xff]
        %v847 = vld [vmem:[#allocation8 + $0x38] sm:$0xff]
        %v848 = vld [vmem:[%s7] sm:$0x1]
        %v850 = vlaneseq
        %v851 = vshrl.u32 %v850, 7
        %v852 = vsub.s32 0, %v851
        %v853 = vrot.slane %v848, %v852
        %v856 = vsel %vm547, %v839, 0
        %858 = vmatprep.subr.mxu0 0.0
        %859 = vmatpush1.msra.mxu0 %v840
        %860 = vmatprep.subr.mxu0 0.0
        %861 = vmatpush1.msra.mxu0 %v841
        %862 = vmatprep.subr.mxu0 0.0
        %863 = vmatpush1.msra.mxu0 %v842
        %864 = vmatprep.subr.mxu0 0.0
        %865 = vmatpush1.msra.mxu0 %v843
        %866 = vmatprep.subr.mxu0 0.0
        %867 = vmatpush1.msra.mxu0 %v844
        %868 = vmatprep.subr.mxu0 0.0
        %869 = vmatpush1.msra.mxu0 %v845
        %870 = vmatprep.subr.mxu0 0.0
        %871 = vmatpush1.msra.mxu0 %v846
        %872 = vmatprep.subr.mxu0 0.0
        %873 = vmatpush1.msra.mxu0 %v847
        %874 = vmatprep.subr.mxu0 0.0
        %875 = vmatpush1.msra.mxu0 0.0
        %876 = vmatprep.subr.mxu0 0.0
        %877 = vmatpush1.msra.mxu0 0.0
        %878 = vmatprep.subr.mxu0 0.0
        %879 = vmatpush1.msra.mxu0 0.0
        %880 = vmatprep.subr.mxu0 0.0
        %881 = vmatpush1.msra.mxu0 0.0
        %882 = vmatprep.subr.mxu0 0.0
        %883 = vmatpush1.msra.mxu0 0.0
        %884 = vmatprep.subr.mxu0 0.0
        %885 = vmatpush1.msra.mxu0 0.0
        %886 = vmatprep.subr.mxu0 0.0
        %887 = vmatpush1.msra.mxu0 0.0
        %888 = vmatprep.subr.mxu0 0.0
        %889 = vmatpush1.msra.mxu0 0.0
        %890 = vmatprep.subr.mxu0 0.0
        %891 = vmatpush1.msra.mxu0 0.0
        %892 = vmatprep.subr.mxu0 0.0
        %893 = vmatpush1.msra.mxu0 0.0
        %894 = vmatprep.subr.mxu0 0.0
        %895 = vmatpush1.msra.mxu0 0.0
        %896 = vmatprep.subr.mxu0 0.0
        %897 = vmatpush1.msra.mxu0 0.0
        %898 = vmatprep.subr.mxu0 0.0
        %899 = vmatpush1.msra.mxu0 0.0
        %900 = vmatprep.subr.mxu0 0.0
        %901 = vmatpush1.msra.mxu0 0.0
        %902 = vmatprep.subr.mxu0 0.0
        %903 = vmatpush1.msra.mxu0 0.0
        %904 = vmatprep.subr.mxu0 0.0
        %905 = vmatpush1.msra.mxu0 0.0
        %906 = vmatprep.subr.mxu0 0.0
        %907 = vmatpush1.msra.mxu0 0.0
        %908 = vmatprep.subr.mxu0 0.0
        %909 = vmatpush1.msra.mxu0 0.0
        %910 = vmatprep.subr.mxu0 0.0
        %911 = vmatpush1.msra.mxu0 0.0
        %912 = vmatprep.subr.mxu0 0.0
        %913 = vmatpush1.msra.mxu0 0.0
        %914 = vmatprep.subr.mxu0 0.0
        %915 = vmatpush1.msra.mxu0 0.0
        %916 = vmatprep.subr.mxu0 0.0
        %917 = vmatpush1.msra.mxu0 0.0
        %918 = vmatprep.subr.mxu0 0.0
        %919 = vmatpush1.msra.mxu0 0.0
        %920 = vmatprep.subr.mxu0 0.0
        %921 = vmatpush1.msra.mxu0 0.0
        %922 = vmatprep.mubr.f32.mxu0 0.0
        %923 = vmatmul.mubr.f32.gmra.mrb[0].mxu0 %v856
        %v924 = vpop.f32.mrb[0].mxu0
        %v925 = vadd.f32 %v853, %v924
        %v926 = vpop.f32.mrb[0].mxu0
        %927 = vdwg.mxu0
        %v928 = vld [vmem:[%s8] sm:$0x1]
        %v930 = vlaneseq
        %v931 = vshrl.u32 %v930, 7
        %v932 = vsub.s32 0, %v931
        %v933 = vrot.slane %v928, %v932
        %v935 = vmul.f32 %v839, %v933
        %v936 = vsel %vm547, %v935, 0.0
        %937 = vadd.xlane.f32.xlu0 %v936
        %v938 = vpop.xlane.xlu0 %937
        %v939 = vld [vmem:[#allocation2] sm:$0x1]
        %v941 = vlaneseq
        %v942 = vshrl.u32 %v941, 7
        %v943 = vsub.s32 0, %v942
        %v944 = vrot.slane %v939, %v943
        %v946 = vadd.f32 %v938, %v944
        %947 = vmax.xlane.f32.xlu0 %v925
        %v948 = vpop.xlane.xlu0 %947
        %vm949 = vcmp.eq.f32.partialorder %v925, %v948
        %v950 = vsel %vm949, %v461, 128
        %v951 = vand.u32 %v950, 65535
        %v952 = vshra.s32 %v950, 16
        %v953 = vcvt.s32.f32 %v951
        %v954 = vcvt.s32.f32 %v952
        %955 = vmin.xlane.f32.xlu0 %v954
        %v956 = vpop.xlane.xlu0 %955
        %vm957 = vcmp.eq.f32.partialorder %v954, %v956
        %v958 = vsel %vm957, %v953, inf
        %959 = vmin.xlane.f32.xlu0 %v958
        %v960 = vpop.xlane.xlu0 %959
        %v961 = vcvt.f32.s32 %v960
        %v962 = vcvt.f32.s32 %v956
        %v963 = vshll.u32 %v962, 16
        %v964 = vadd.s32 %v963, %v961
        %vm965 = vcmask 7168
        %966 = vst.msk [vmem:[%s454] sm:$0xff] %vm965, %v964
        %967 = vst.msk [vmem:[%s458] sm:$0xff] %vm965, %v946
        %p968 = scmp.lt.s32.totalorder %s30, 1
        %s969 = scalar_select %p968, %s30, 1
        %s970 = smul.addr %s969, 8
        %s971 = scalar_lea.vmem %s10, %s970
        %p972 = scmp.lt.s32.totalorder %s30, 1
        %s973 = scalar_select %p972, %s30, 1
        %s974 = smul.addr %s973, 8
        %s975 = scalar_lea.vmem %s11, %s974
        // Predicated region
        $region77: #{tpu_custom_call.1} parent=59 // pred_check
          %p976 = pneg %p263
        $region78: #{tpu_custom_call.1} parent=59 // pred_check_branch
          %978 = sbr.rel (%p976) target = $region80
        $region79: #{tpu_custom_call.1} parent=59 // pred_region
          _
        $region80: #{tpu_custom_call.1} parent=59 // pred_fallthru
          _
        // Predicated region
        $region81: #{tpu_custom_call.1} parent=59 // pred_check
          %p979 = pneg %p289
        $region82: #{tpu_custom_call.1} parent=59 // pred_check_branch
          %981 = sbr.rel (%p979) target = $region84
        $region83: #{tpu_custom_call.1} parent=59 // pred_region
          _
        $region84: #{tpu_custom_call.1} parent=59 // pred_fallthru
          _
      $region60: #{tpu_custom_call.1} parent=5 // pred_fallthru
        _
      %p982 = scmp.le.s32.totalorder 2, %s25
      // Predicated region
      $region85: #{tpu_custom_call.1} parent=5 // pred_check
        %p983 = pneg %p982
      $region86: #{tpu_custom_call.1} parent=5 // pred_check_branch
        %985 = sbr.rel (%p983) target = $region88
      $region87: #{tpu_custom_call.1} parent=5 // pred_region
        %s986 = ssub.s32 %s25, 2
        // Predicated region
        $region89: #{tpu_custom_call.1} parent=87 // pred_check
          %p987 = pneg %p269
        $region90: #{tpu_custom_call.1} parent=87 // pred_check_branch
          %989 = sbr.rel (%p987) target = $region92
        $region91: #{tpu_custom_call.1} parent=87 // pred_region
          %p990 = scmp.lt.s32.totalorder %s31, 1
          %s991 = scalar_select %p990, %s31, 1
          %s992 = smul.addr %s991, 8
          %s993 = scalar_lea.vmem %s10, %s992
        $region92: #{tpu_custom_call.1} parent=87 // pred_fallthru
          _
        // Predicated region
        $region93: #{tpu_custom_call.1} parent=87 // pred_check
          %p994 = pneg %p295
        $region94: #{tpu_custom_call.1} parent=87 // pred_check_branch
          %996 = sbr.rel (%p994) target = $region96
        $region95: #{tpu_custom_call.1} parent=87 // pred_region
          %p997 = scmp.lt.s32.totalorder %s31, 1
          %s998 = scalar_select %p997, %s31, 1
          %s999 = smul.addr %s998, 8
          %s1000 = scalar_lea.vmem %s11, %s999
        $region96: #{tpu_custom_call.1} parent=87 // pred_fallthru
          _
      $region88: #{tpu_custom_call.1} parent=5 // pred_fallthru
        _
    $region6: #{tpu_custom_call.1} parent=1 // loop_footer
      %s29 = sadd.s32 1, %s25
    $region7: #{tpu_custom_call.1} parent=1 // loop_footer_branch
      %24 = sbr.rel target = $region3
    $region8: #{tpu_custom_call.1} parent=1 // loop_exit
      _
    %1001 = vsyncpa [#allocation4], 1
    %s1002 = scalar_lea.sflag [#allocation4], 1
    %1003 = vsyncpa %s1002, 1
    %1004 = vsyncpa [#allocation6], 1
    %1005 = vsyncpa [#allocation9], 1

</llo_original>
